<compile_context>
chip_gen: v7x
topology: tpu7x:2x2x1
jax: 0.10.0
libtpu: 0.0.40
codegen_flags: <defaults>
</compile_context>

<pallas_src>
import functools

import jax
import jax.numpy as jnp
from jax.experimental import pallas as pl
from jax.experimental.pallas import tpu as pltpu

VMEM = pltpu.MemorySpace.VMEM


# ---------------- fused Pallas kernel ----------------

def _bottom_block_kernel(x_cm_ref, x_rows_ref, wqkv_ref, bqkv_ref, wo_ref, bo_ref,
                         y_ref, q_sc, k_sc, v_sc,
                         *, nh, nsp, dk, dv, kf, mxu_dtype):
    f32 = jnp.float32

    # (1) fused q/k/v projection: one MXU matmul over the concatenated weight.
    #     1/sqrt(dk) is already folded into the q columns of w_qkv / b_qkv.
    x_rows = x_rows_ref[...]                                       # (nsp, c_in) f32
    qkv = jnp.dot(x_rows.astype(mxu_dtype), wqkv_ref[...],
                  preferred_element_type=f32) + bqkv_ref[...]      # (nsp, 2kf+vf) f32

    # (2) head split into head-major row order (head, batch*pos), kept in VMEM
    #     scratch. Any row permutation applied consistently to q/k/v leaves the
    #     (row-mixing) attention output unchanged; the per-head output transform
    #     in step (4) maps it back to the PyTorch channel layout.
    for h in range(nh):
        rows = slice(h * nsp, (h + 1) * nsp)
        q_sc[rows, :] = qkv[:, h * dk:(h + 1) * dk]
        k_sc[rows, :] = qkv[:, kf + h * dk:kf + (h + 1) * dk]
        v_sc[rows, :] = qkv[:, 2 * kf + h * dv:2 * kf + (h + 1) * dv]

    q = q_sc[...].astype(mxu_dtype)                                # (n, dk)
    k = k_sc[...].astype(mxu_dtype)                                # (n, dk)
    v = v_sc[...].astype(mxu_dtype)                                # (n, dv)

    # (3) full attention over ALL (batch, position, head) rows, exactly like the
    #     PyTorch code (it flattens batch and head into the attention axes).
    # TODO(synk): for non-toy spatial sizes, tile this with a flash-style grid
    # (parallel q-row tiles, "arbitrary" kv axis, online softmax) instead of one
    # VMEM-resident (n, n) score block.
    s = jax.lax.dot_general(q, k, (((1,), (1,)), ((), ())),
                            preferred_element_type=f32)            # (n, n) f32
    m = jnp.max(s, axis=-1, keepdims=True)
    p = jnp.exp(s - m)                                             # f32 elementwise
    l = jnp.sum(p, axis=-1, keepdims=True)
    # TODO(synk): nn.Dropout(p=0.5) on the attention matrix is identity in eval mode.
    o = jnp.dot(p.astype(mxu_dtype), v, preferred_element_type=f32)   # (n, dv)
    # normalize AFTER the PV matmul: n*dv elements instead of n*n, EUP reciprocal.
    o = o * pl.reciprocal(l, approx=True)                          # (n, dv) f32

    # (4) output 1x1 conv + bias + residual, produced directly in the lane-dense
    #     channel-major (co, nsp) layout. Per-head slices of Wo undo the
    #     head-major row order of `o` (equivalent to the PyTorch head concat).
    wo = wo_ref[...]                                               # (co, vf) f32
    acc = bo_ref[...] + x_cm_ref[...]                              # (co, nsp) f32
    for h in range(nh):
        wo_h = wo[:, h * dv:(h + 1) * dv].astype(mxu_dtype)        # (co, dv)
        o_h = o[h * nsp:(h + 1) * nsp, :].astype(mxu_dtype)        # (nsp, dv)
        acc = acc + jax.lax.dot_general(
            wo_h, o_h, (((1,), (1,)), ((), ())),
            preferred_element_type=f32)                            # (co, nsp)
    y_ref[...] = acc


# ---------------- parameter preparation (one-time transform) ----------------

def make_bottom_block_params(Wq, bq, Wk, bk, Wv, bv, Wo, bo, num_heads,
                             mxu_dtype=jnp.bfloat16):
    """PyTorch-layout weights ([Cout, Cin] / [Cout]) -> fused kernel params."""
    kf = Wq.shape[0]
    assert kf % num_heads == 0 and Wv.shape[0] % num_heads == 0
    dk = kf // num_heads
    inv_scale = 1.0 / (float(dk) ** 0.5)
    # fold 1/sqrt(dk) into q; fuse q/k/v into a single (c_in, 2kf+vf) matmul weight.
    w_qkv = jnp.concatenate([Wq.T * inv_scale, Wk.T, Wv.T], axis=1).astype(mxu_dtype)
    b_qkv = jnp.concatenate([bq * inv_scale, bk, bv])[None, :].astype(jnp.float32)
    return dict(num_heads=num_heads, key_filters=kf,
                w_qkv=w_qkv, b_qkv=b_qkv,
                wo=Wo.astype(jnp.float32),        # (co, vf), sliced per head in-kernel
                bo=bo[:, None].astype(jnp.float32),
                mxu_dtype=mxu_dtype)


# ---------------- wrapper (layout plumbing only) ----------------

def bottom_block_forward(x_nchw, params):
    B, c_in, H, W = x_nchw.shape
    nh = params["num_heads"]
    w_qkv, b_qkv = params["w_qkv"], params["b_qkv"]
    wo, bo = params["wo"], params["bo"]
    mxu_dtype = params["mxu_dtype"]

    kf = params["key_filters"]
    vf = w_qkv.shape[1] - 2 * kf
    dk, dv = kf // nh, vf // nh
    co = wo.shape[0]
    assert co == c_in, "bottomBlock residual add requires output_filters == in_channel"

    nsp = B * H * W              # spatial positions across all batches
    n = nsp * nh                 # attention axis length (batch*H*W*heads)
    assert nsp % 8 == 0, "B*H*W must be a multiple of 8 (sublane alignment)"

    # layout plumbing (XLA side): channel-major (lane-dense, used for residual +
    # aliased output) and row-major (used for the projection matmul) views of x.
    x_cm = jnp.transpose(x_nchw, (1, 0, 2, 3)).reshape(c_in, nsp).astype(jnp.float32)
    x_rows = jnp.transpose(x_nchw, (0, 2, 3, 1)).reshape(nsp, c_in).astype(jnp.float32)

    vspec = pl.BlockSpec(memory_space=VMEM)
    kernel = functools.partial(_bottom_block_kernel, nh=nh, nsp=nsp, dk=dk, dv=dv,
                               kf=kf, mxu_dtype=mxu_dtype)

    y_cm = pl.pallas_call(
        kernel,
        out_shape=jax.ShapeDtypeStruct((co, nsp), jnp.float32),   # lane-dense store
        in_specs=[vspec] * 6,
        out_specs=vspec,
        scratch_shapes=[pltpu.VMEM((n, dk), jnp.float32),         # q (head-major rows)
                        pltpu.VMEM((n, dk), jnp.float32),         # k
                        pltpu.VMEM((n, dv), jnp.float32)],        # v
        input_output_aliases={0: 0},     # y reuses x_cm's HBM buffer (residual path)
    )(x_cm, x_rows, w_qkv, b_qkv, wo, bo)

    return jnp.transpose(y_cm.reshape(co, B, H, W), (1, 0, 2, 3))


# ---------------- pure-JAX reference (mirrors the PyTorch forward, f32) ----------------

def _reference_forward(x, Wq, bq, Wk, bk, Wv, bv, Wo, bo, nh):
    def conv1x1(t, w, b):
        return jnp.einsum("oc,bchw->bohw", w, t) + b[None, :, None, None]

    q = conv1x1(x, Wq, bq)
    k = conv1x1(x, Wk, bk)
    v = conv1x1(x, Wv, bv)
    dk = Wq.shape[0] // nh

    def flat_heads(t):
        t = jnp.transpose(t, (0, 2, 3, 1))
        b, h, w, c = t.shape
        return t.reshape(b * h * w * nh, c // nh)

    qf = flat_heads(q) / (dk ** 0.5)
    kf_ = flat_heads(k)
    vf_ = flat_heads(v)
    A = jax.nn.softmax(qf @ kf_.T, axis=1)   # dropout is identity in eval mode
    O = A @ vf_
    B, _, H, W = x.shape
    O = jnp.transpose(O.reshape(B, H, W, -1), (0, 3, 1, 2))
    return conv1x1(O, Wo, bo) + x


# ---------------- main ----------------

if __name__ == "__main__":
    key = jax.random.PRNGKey(0)
    B, c_in, H, W = 2, 8, 8, 8
    key_filters, value_filters, num_heads = 16, 16, 2
    output_filters = c_in  # required for the residual add in bottomBlock

    ks = jax.random.split(key, 9)
    x = jax.random.normal(ks[0], (B, c_in, H, W), jnp.float32)
    # Deterministic synthetic parameters in PyTorch layout [Cout, Cin] / [Cout].
    Wq = 0.1 * jax.random.normal(ks[1], (key_filters, c_in), jnp.float32)
    bq = 0.1 * jax.random.normal(ks[2], (key_filters,), jnp.float32)
    Wk = 0.1 * jax.random.normal(ks[3], (key_filters, c_in), jnp.float32)
    bk = 0.1 * jax.random.normal(ks[4], (key_filters,), jnp.float32)
    Wv = 0.1 * jax.random.normal(ks[5], (value_filters, c_in), jnp.float32)
    bv = 0.1 * jax.random.normal(ks[6], (value_filters,), jnp.float32)
    Wo = 0.1 * jax.random.normal(ks[7], (output_filters, value_filters), jnp.float32)
    bo = 0.1 * jax.random.normal(ks[8], (output_filters,), jnp.float32)

    params = make_bottom_block_params(Wq, bq, Wk, bk, Wv, bv, Wo, bo, num_heads)

    out = bottom_block_forward(x, params)
    out = jax.block_until_ready(out)

    ref = _reference_forward(x, Wq, bq, Wk, bk, Wv, bv, Wo, bo, num_heads)
    assert out.shape == (B, output_filters, H, W), out.shape
    max_err = float(jnp.max(jnp.abs(out - ref)))
    # bf16 MXU operands (f32 accumulation) vs. a pure-f32 reference -> loose tolerance.
    assert jnp.allclose(out, ref, rtol=2e-2, atol=2e-2), max_err
    print("KERNEL_OK")
</pallas_src>

<mosaic_0001>
module attributes {stable_mosaic.version = 11 : i64} {
  func.func @_bottom_block_kernel(%arg0: memref<8x128xf32, #tpu.memory_space<vmem>>, %arg1: memref<128x8xf32, #tpu.memory_space<vmem>>, %arg2: memref<8x48xbf16, #tpu.memory_space<vmem>>, %arg3: memref<1x48xf32, #tpu.memory_space<vmem>>, %arg4: memref<8x16xf32, #tpu.memory_space<vmem>>, %arg5: memref<8x1xf32, #tpu.memory_space<vmem>>, %arg6: memref<8x128xf32, #tpu.memory_space<vmem>>, %arg7: memref<256x8xf32, #tpu.memory_space<vmem>>, %arg8: memref<256x8xf32, #tpu.memory_space<vmem>>, %arg9: memref<256x8xf32, #tpu.memory_space<vmem>>) attributes {dimension_semantics = [], scalar_prefetch = 0 : i64, scratch_operands = 3 : i64, tpu.core_type = #tpu.core_type<tc>} {
    %c0 = arith.constant 0 : index
    %c0_0 = arith.constant 0 : index
    %0 = vector.load %arg1[%c0, %c0_0] : memref<128x8xf32, #tpu.memory_space<vmem>>, vector<128x8xf32>
    %1 = arith.truncf %0 : vector<128x8xf32> to vector<128x8xbf16>
    %c0_1 = arith.constant 0 : index
    %c0_2 = arith.constant 0 : index
    %2 = vector.load %arg2[%c0_1, %c0_2] : memref<8x48xbf16, #tpu.memory_space<vmem>>, vector<8x48xbf16>
    %cst = arith.constant dense<0.000000e+00> : vector<128x48xf32>
    %3 = tpu.matmul %1, %2, %cst {dimension_numbers = #tpu.dot_dimension_numbers<[1], [0], [0], [1], [0, 0, 1, 1], [], []>} : vector<128x8xbf16>, vector<8x48xbf16>, vector<128x48xf32> -> vector<128x48xf32>
    %c0_3 = arith.constant 0 : index
    %c0_4 = arith.constant 0 : index
    %4 = vector.load %arg3[%c0_3, %c0_4] : memref<1x48xf32, #tpu.memory_space<vmem>>, vector<1x48xf32>
    %5 = vector.broadcast %4 : vector<1x48xf32> to vector<128x48xf32>
    %6 = arith.addf %3, %5 : vector<128x48xf32>
    %7 = vector.extract_strided_slice %6 {offsets = [0, 0], sizes = [128, 8], strides = [1, 1]} : vector<128x48xf32> to vector<128x8xf32>
    %c0_5 = arith.constant 0 : index
    %c0_6 = arith.constant 0 : index
    %8 = vector.load %arg7[%c0_5, %c0_6] : memref<256x8xf32, #tpu.memory_space<vmem>>, vector<128x8xf32>
    tpu.vector_store %arg7[%c0_5, %c0_6], %7 {strides = array<i32>} : memref<256x8xf32, #tpu.memory_space<vmem>>, vector<128x8xf32>,
    %9 = vector.extract_strided_slice %6 {offsets = [0, 16], sizes = [128, 8], strides = [1, 1]} : vector<128x48xf32> to vector<128x8xf32>
    %c0_7 = arith.constant 0 : index
    %c0_8 = arith.constant 0 : index
    %10 = vector.load %arg8[%c0_7, %c0_8] : memref<256x8xf32, #tpu.memory_space<vmem>>, vector<128x8xf32>
    tpu.vector_store %arg8[%c0_7, %c0_8], %9 {strides = array<i32>} : memref<256x8xf32, #tpu.memory_space<vmem>>, vector<128x8xf32>,
    %11 = vector.extract_strided_slice %6 {offsets = [0, 32], sizes = [128, 8], strides = [1, 1]} : vector<128x48xf32> to vector<128x8xf32>
    %c0_9 = arith.constant 0 : index
    %c0_10 = arith.constant 0 : index
    %12 = vector.load %arg9[%c0_9, %c0_10] : memref<256x8xf32, #tpu.memory_space<vmem>>, vector<128x8xf32>
    tpu.vector_store %arg9[%c0_9, %c0_10], %11 {strides = array<i32>} : memref<256x8xf32, #tpu.memory_space<vmem>>, vector<128x8xf32>,
    %13 = vector.extract_strided_slice %6 {offsets = [0, 8], sizes = [128, 8], strides = [1, 1]} : vector<128x48xf32> to vector<128x8xf32>
    %c128 = arith.constant 128 : index
    %c0_11 = arith.constant 0 : index
    %14 = vector.load %arg7[%c128, %c0_11] : memref<256x8xf32, #tpu.memory_space<vmem>>, vector<128x8xf32>
    tpu.vector_store %arg7[%c128, %c0_11], %13 {strides = array<i32>} : memref<256x8xf32, #tpu.memory_space<vmem>>, vector<128x8xf32>,
    %15 = vector.extract_strided_slice %6 {offsets = [0, 24], sizes = [128, 8], strides = [1, 1]} : vector<128x48xf32> to vector<128x8xf32>
    %c128_12 = arith.constant 128 : index
    %c0_13 = arith.constant 0 : index
    %16 = vector.load %arg8[%c128_12, %c0_13] : memref<256x8xf32, #tpu.memory_space<vmem>>, vector<128x8xf32>
    tpu.vector_store %arg8[%c128_12, %c0_13], %15 {strides = array<i32>} : memref<256x8xf32, #tpu.memory_space<vmem>>, vector<128x8xf32>,
    %17 = vector.extract_strided_slice %6 {offsets = [0, 40], sizes = [128, 8], strides = [1, 1]} : vector<128x48xf32> to vector<128x8xf32>
    %c128_14 = arith.constant 128 : index
    %c0_15 = arith.constant 0 : index
    %18 = vector.load %arg9[%c128_14, %c0_15] : memref<256x8xf32, #tpu.memory_space<vmem>>, vector<128x8xf32>
    tpu.vector_store %arg9[%c128_14, %c0_15], %17 {strides = array<i32>} : memref<256x8xf32, #tpu.memory_space<vmem>>, vector<128x8xf32>,
    %c0_16 = arith.constant 0 : index
    %c0_17 = arith.constant 0 : index
    %19 = vector.load %arg7[%c0_16, %c0_17] : memref<256x8xf32, #tpu.memory_space<vmem>>, vector<256x8xf32>
    %20 = arith.truncf %19 : vector<256x8xf32> to vector<256x8xbf16>
    %c0_18 = arith.constant 0 : index
    %c0_19 = arith.constant 0 : index
    %21 = vector.load %arg8[%c0_18, %c0_19] : memref<256x8xf32, #tpu.memory_space<vmem>>, vector<256x8xf32>
    %22 = arith.truncf %21 : vector<256x8xf32> to vector<256x8xbf16>
    %c0_20 = arith.constant 0 : index
    %c0_21 = arith.constant 0 : index
    %23 = vector.load %arg9[%c0_20, %c0_21] : memref<256x8xf32, #tpu.memory_space<vmem>>, vector<256x8xf32>
    %24 = arith.truncf %23 : vector<256x8xf32> to vector<256x8xbf16>
    %cst_22 = arith.constant dense<0.000000e+00> : vector<256x256xf32>
    %25 = tpu.matmul %20, %22, %cst_22 {dimension_numbers = #tpu.dot_dimension_numbers<[1], [1], [0], [0], [0, 0, 1, 0], [], []>} : vector<256x8xbf16>, vector<256x8xbf16>, vector<256x256xf32> -> vector<256x256xf32>
    %cst_23 = arith.constant dense<0xFF800000> : vector<256xf32>
    %26 = vector.multi_reduction <maximumf>, %25, %cst_23 [1] : vector<256x256xf32> to vector<256xf32>
    %27 = vector.shape_cast %26 : vector<256xf32> to vector<256x1xf32>
    %28 = vector.broadcast %27 : vector<256x1xf32> to vector<256x256xf32>
    %29 = arith.subf %25, %28 : vector<256x256xf32>
    %30 = math.exp %29 : vector<256x256xf32>
    %cst_24 = arith.constant dense<0.000000e+00> : vector<256xf32>
    %31 = vector.multi_reduction <add>, %30, %cst_24 [1] : vector<256x256xf32> to vector<256xf32>
    %32 = vector.shape_cast %31 : vector<256xf32> to vector<256x1xf32>
    %33 = arith.truncf %30 : vector<256x256xf32> to vector<256x256xbf16>
    %cst_25 = arith.constant dense<0.000000e+00> : vector<256x8xf32>
    %34 = tpu.matmul %33, %24, %cst_25 {dimension_numbers = #tpu.dot_dimension_numbers<[1], [0], [0], [1], [0, 0, 1, 1], [], []>} : vector<256x256xbf16>, vector<256x8xbf16>, vector<256x8xf32> -> vector<256x8xf32>
    %35 = tpu.reciprocal %32 {approx = true} : vector<256x1xf32> -> vector<256x1xf32>
    %36 = vector.broadcast %35 : vector<256x1xf32> to vector<256x8xf32>
    %37 = arith.mulf %34, %36 : vector<256x8xf32>
    %c0_26 = arith.constant 0 : index
    %c0_27 = arith.constant 0 : index
    %38 = vector.load %arg4[%c0_26, %c0_27] : memref<8x16xf32, #tpu.memory_space<vmem>>, vector<8x16xf32>
    %c0_28 = arith.constant 0 : index
    %c0_29 = arith.constant 0 : index
    %39 = vector.load %arg5[%c0_28, %c0_29] : memref<8x1xf32, #tpu.memory_space<vmem>>, vector<8x1xf32>
    %c0_30 = arith.constant 0 : index
    %c0_31 = arith.constant 0 : index
    %40 = vector.load %arg0[%c0_30, %c0_31] : memref<8x128xf32, #tpu.memory_space<vmem>>, vector<8x128xf32>
    %41 = vector.broadcast %39 : vector<8x1xf32> to vector<8x128xf32>
    %42 = arith.addf %41, %40 : vector<8x128xf32>
    %43 = vector.extract_strided_slice %38 {offsets = [0, 0], sizes = [8, 8], strides = [1, 1]} : vector<8x16xf32> to vector<8x8xf32>
    %44 = arith.truncf %43 : vector<8x8xf32> to vector<8x8xbf16>
    %45 = vector.extract_strided_slice %37 {offsets = [0, 0], sizes = [128, 8], strides = [1, 1]} : vector<256x8xf32> to vector<128x8xf32>
    %46 = arith.truncf %45 : vector<128x8xf32> to vector<128x8xbf16>
    %cst_32 = arith.constant dense<0.000000e+00> : vector<8x128xf32>
    %47 = tpu.matmul %44, %46, %cst_32 {dimension_numbers = #tpu.dot_dimension_numbers<[1], [1], [0], [0], [0, 0, 1, 0], [], []>} : vector<8x8xbf16>, vector<128x8xbf16>, vector<8x128xf32> -> vector<8x128xf32>
    %48 = arith.addf %42, %47 : vector<8x128xf32>
    %49 = vector.extract_strided_slice %38 {offsets = [0, 8], sizes = [8, 8], strides = [1, 1]} : vector<8x16xf32> to vector<8x8xf32>
    %50 = arith.truncf %49 : vector<8x8xf32> to vector<8x8xbf16>
    %51 = vector.extract_strided_slice %37 {offsets = [128, 0], sizes = [128, 8], strides = [1, 1]} : vector<256x8xf32> to vector<128x8xf32>
    %52 = arith.truncf %51 : vector<128x8xf32> to vector<128x8xbf16>
    %cst_33 = arith.constant dense<0.000000e+00> : vector<8x128xf32>
    %53 = tpu.matmul %50, %52, %cst_33 {dimension_numbers = #tpu.dot_dimension_numbers<[1], [1], [0], [0], [0, 0, 1, 0], [], []>} : vector<8x8xbf16>, vector<128x8xbf16>, vector<8x128xf32> -> vector<8x128xf32>
    %54 = arith.addf %48, %53 : vector<8x128xf32>
    %c0_34 = arith.constant 0 : index
    %c0_35 = arith.constant 0 : index
    %55 = vector.load %arg6[%c0_34, %c0_35] : memref<8x128xf32, #tpu.memory_space<vmem>>, vector<8x128xf32>
    tpu.vector_store %arg6[%c0_34, %c0_35], %54 {strides = array<i32>} : memref<8x128xf32, #tpu.memory_space<vmem>>, vector<8x128xf32>,
    return
  }
}

</mosaic_0001>

<llo_original>
// kernel: tpu_custom_call.1
$region0: #{tpu_custom_call.1}
  #allocation0 [shape = 'u32[]', space=smem, size = 0x4, offset = 0x4, fixed_abs, tag = 'smem constant byte address 0x4 - core index']
  #allocation1 [shape = 'u32[144,128]{1,0:T(1,128)}', space=vmem, size = 0x12000, scoped, tag = 'internal scratch']
  #allocation2 [shape = 'f32[256,8]{1,0:T(8,128)}', space=vmem, size = 0x20000, scoped, tag = 'scratch operand']
  #allocation3 [shape = 'f32[256,8]{1,0:T(8,128)}', space=vmem, size = 0x20000, scoped, tag = 'scratch operand']
  #allocation4 [shape = 'f32[256,8]{1,0:T(8,128)}', space=vmem, size = 0x20000, scoped, tag = 'scratch operand']
  %s0 = inlined_call_operand.hbm [shape: f32[8,128], index: 0, kind: input, shape index: {}, may-alias: {0,6}]
  %s1 = inlined_call_operand.vmem [shape: f32[128,8], index: 1, kind: input, shape index: {}]
  %s2 = inlined_call_operand.vmem [shape: bf16[8,48], index: 2, kind: input, shape index: {}]
  %s3 = inlined_call_operand.vmem [shape: f32[1,48], index: 3, kind: input, shape index: {}]
  %s4 = inlined_call_operand.vmem [shape: f32[8,16], index: 4, kind: input, shape index: {}]
  %s5 = inlined_call_operand.vmem [shape: f32[8,1], index: 5, kind: input, shape index: {}]
  %s6 = inlined_call_operand.hbm [shape: f32[8,128], index: 6, kind: output, shape index: {}, may-alias: {0,6}]
  %s7 = sld [smem:[#allocation0]]
  $region38: #{tpu_custom_call.1} parent=0
    _
  %s9 = ssub.s32 1, %s7
  %s10 = scalar_select 0, %s9, %s7
  $region1: #{tpu_custom_call.1} parent=0
    #allocation5 [shape = 'u8[4096]{0}', space=vmem, size = 0x1000, scoped, tag = 'input window, operand 0, single buffered']
    #allocation6 [shape = 's32[1]{0}', space=sflag, size = 0x4, scoped, tag = 'scoped memory for tpu_custom_call.1']
    #allocation7 [shape = 's32[1]{0}', space=sflag, size = 0x4, scoped, tag = 'scoped memory for tpu_custom_call.1']
    #allocation8 [shape = 'u8[4096]{0}', space=vmem, size = 0x1000, scoped, tag = 'output window, operand 0, single buffered']
    %11 = vsyncpa [#allocation6], 0
    %12 = vsyncpa [#allocation7], 0
    // Predicated region
    $region2: #{tpu_custom_call.1} parent=1 // pred_check
      _
    $region3: #{tpu_custom_call.1} parent=1 // pred_check_branch
      %14 = sbr.rel (0) target = $region5
    $region4: #{tpu_custom_call.1} parent=1 // pred_region
      %s16 = ssub.s32 128, 128
      %17 = vsyncadd [#allocation6], %s16
      %s19 = sshll.u32 [#allocation5], 4
      %s20 = int_to_ptr.vmem [resolvable:$true] %s19
      %22 = dma.hbm_to_vmem [thread:$0]  %s0, 128, %s20, [#allocation6]
    $region5: #{tpu_custom_call.1} parent=1 // pred_fallthru
      _
    // Predicated region
    $region6: #{tpu_custom_call.1} parent=1 // pred_check
      _
    $region7: #{tpu_custom_call.1} parent=1 // pred_check_branch
      %24 = sbr.rel (0) target = $region9
    $region8: #{tpu_custom_call.1} parent=1 // pred_region
      _
    $region9: #{tpu_custom_call.1} parent=1 // pred_fallthru
      _
    // Predicated region
    $region10: #{tpu_custom_call.1} parent=1 // pred_check
      _
    $region11: #{tpu_custom_call.1} parent=1 // pred_check_branch
      %26 = sbr.rel (0) target = $region13
    $region12: #{tpu_custom_call.1} parent=1 // pred_region
      _
    $region13: #{tpu_custom_call.1} parent=1 // pred_fallthru
      _
    // Predicated region
    $region14: #{tpu_custom_call.1} parent=1 // pred_check
      _
    $region15: #{tpu_custom_call.1} parent=1 // pred_check_branch
      %28 = sbr.rel (0) target = $region17
    $region16: #{tpu_custom_call.1} parent=1 // pred_region
      _
    $region17: #{tpu_custom_call.1} parent=1 // pred_fallthru
      _
    // Predicated region
    $region18: #{tpu_custom_call.1} parent=1 // pred_check
      _
    $region19: #{tpu_custom_call.1} parent=1 // pred_check_branch
      %30 = sbr.rel (0) target = $region21
    $region20: #{tpu_custom_call.1} parent=1 // pred_region
      _
    $region21: #{tpu_custom_call.1} parent=1 // pred_fallthru
      _
    // Predicated region
    $region22: #{tpu_custom_call.1} parent=1 // pred_check
      _
    $region23: #{tpu_custom_call.1} parent=1 // pred_check_branch
      %32 = sbr.rel (0) target = $region25
    $region24: #{tpu_custom_call.1} parent=1 // pred_region
      _
    $region25: #{tpu_custom_call.1} parent=1 // pred_fallthru
      _
    // Predicated region
    $region26: #{tpu_custom_call.1} parent=1 // pred_check
      _
    $region27: #{tpu_custom_call.1} parent=1 // pred_check_branch
      %34 = sbr.rel (0) target = $region29
    $region28: #{tpu_custom_call.1} parent=1 // pred_region
      %35 = dma.done [#allocation6], 128
    $region29: #{tpu_custom_call.1} parent=1 // pred_fallthru
      _
    %v37 = vld [vmem:[%s1] sm:$0xff]
    %v38 = vld [vmem:[%s1 + $0x8] sm:$0xff]
    %v39 = vld [vmem:[%s1 + $0x10] sm:$0xff]
    %v40 = vld [vmem:[%s1 + $0x18] sm:$0xff]
    %v41 = vld [vmem:[%s1 + $0x20] sm:$0xff]
    %v42 = vld [vmem:[%s1 + $0x28] sm:$0xff]
    %v43 = vld [vmem:[%s1 + $0x30] sm:$0xff]
    %v44 = vld [vmem:[%s1 + $0x38] sm:$0xff]
    %v45 = vld [vmem:[%s1 + $0x40] sm:$0xff]
    %v46 = vld [vmem:[%s1 + $0x48] sm:$0xff]
    %v47 = vld [vmem:[%s1 + $0x50] sm:$0xff]
    %v48 = vld [vmem:[%s1 + $0x58] sm:$0xff]
    %v49 = vld [vmem:[%s1 + $0x60] sm:$0xff]
    %v50 = vld [vmem:[%s1 + $0x68] sm:$0xff]
    %v51 = vld [vmem:[%s1 + $0x70] sm:$0xff]
    %v52 = vld [vmem:[%s1 + $0x78] sm:$0xff]
    %v53 = vpack.c.bf16 %v38, %v37
    %v54 = vpack.c.bf16 %v40, %v39
    %v55 = vpack.c.bf16 %v42, %v41
    %v56 = vpack.c.bf16 %v44, %v43
    %v57 = vpack.c.bf16 %v46, %v45
    %v58 = vpack.c.bf16 %v48, %v47
    %v59 = vpack.c.bf16 %v50, %v49
    %v60 = vpack.c.bf16 %v52, %v51
    %v61 = vld [vmem:[%s2] sm:$0xf]
    %v62 = vld [vmem:[%s3] sm:$0x1]
    %v64 = vlaneseq
    %v65 = vshrl.u32 %v64, 7
    %v66 = vsub.s32 0, %v65
    %v67 = vrot.slane %v62, %v66
    %vm69 = vcmask 64512
    %v71 = vsel %vm69, %v53, 0
    %v74 = vsel %vm69, %v54, 0
    %v77 = vsel %vm69, %v55, 0
    %v80 = vsel %vm69, %v56, 0
    %v83 = vsel %vm69, %v57, 0
    %v86 = vsel %vm69, %v58, 0
    %v89 = vsel %vm69, %v59, 0
    %v92 = vsel %vm69, %v60, 0
    %vm94 = vcmask 1043456
    %v96 = vsel %vm94, %v61, 0
    %98 = vmatprep.subr.bf16.mxu0 0
    %99 = vmatpush1.bf16.msra.mxu0 %v96
    %100 = vmatprep.subr.bf16.mxu0 0
    %101 = vmatpush1.bf16.msra.mxu0 0
    %102 = vmatprep.subr.bf16.mxu0 0
    %103 = vmatpush1.bf16.msra.mxu0 0
    %104 = vmatprep.subr.bf16.mxu0 0
    %105 = vmatpush1.bf16.msra.mxu0 0
    %106 = vmatprep.subr.bf16.mxu0 0
    %107 = vmatpush1.bf16.msra.mxu0 0
    %108 = vmatprep.subr.bf16.mxu0 0
    %109 = vmatpush1.bf16.msra.mxu0 0
    %110 = vmatprep.subr.bf16.mxu0 0
    %111 = vmatpush1.bf16.msra.mxu0 0
    %112 = vmatprep.subr.bf16.mxu0 0
    %113 = vmatpush1.bf16.msra.mxu0 0
    %114 = vmatprep.subr.bf16.mxu0 0
    %115 = vmatpush1.bf16.msra.mxu0 0
    %116 = vmatprep.subr.bf16.mxu0 0
    %117 = vmatpush1.bf16.msra.mxu0 0
    %118 = vmatprep.subr.bf16.mxu0 0
    %119 = vmatpush1.bf16.msra.mxu0 0
    %120 = vmatprep.subr.bf16.mxu0 0
    %121 = vmatpush1.bf16.msra.mxu0 0
    %122 = vmatprep.subr.bf16.mxu0 0
    %123 = vmatpush1.bf16.msra.mxu0 0
    %124 = vmatprep.subr.bf16.mxu0 0
    %125 = vmatpush1.bf16.msra.mxu0 0
    %126 = vmatprep.subr.bf16.mxu0 0
    %127 = vmatpush1.bf16.msra.mxu0 0
    %128 = vmatprep.subr.bf16.mxu0 0
    %129 = vmatpush1.bf16.msra.mxu0 0
    %130 = vmatprep.mubr.bf16.mxu0 0
    %131 = vmatmul.mubr.bf16.gmra.mrb[0].mxu0 %v71
    %v132 = vpop.f32.mrb[0].mxu0
    %v133 = vadd.f32 %v67, %v132
    %v134 = vpop.f32.mrb[0].mxu0
    %v135 = vpop.f32.mrb[0].mxu0
    %v136 = vadd.f32 %v67, %v135
    %v137 = vpop.f32.mrb[0].mxu0
    %138 = vmatprep.mubr.bf16.mxu0 0
    %139 = vmatmul.mubr.bf16.gmra.mrb[0].mxu0 %v74
    %v140 = vpop.f32.mrb[0].mxu0
    %v141 = vadd.f32 %v67, %v140
    %v142 = vpop.f32.mrb[0].mxu0
    %v143 = vpop.f32.mrb[0].mxu0
    %v144 = vadd.f32 %v67, %v143
    %v145 = vpop.f32.mrb[0].mxu0
    %146 = vmatprep.mubr.bf16.mxu0 0
    %147 = vmatmul.mubr.bf16.gmra.mrb[0].mxu0 %v77
    %v148 = vpop.f32.mrb[0].mxu0
    %v149 = vadd.f32 %v67, %v148
    %v150 = vpop.f32.mrb[0].mxu0
    %v151 = vpop.f32.mrb[0].mxu0
    %v152 = vadd.f32 %v67, %v151
    %v153 = vpop.f32.mrb[0].mxu0
    %154 = vmatprep.mubr.bf16.mxu0 0
    %155 = vmatmul.mubr.bf16.gmra.mrb[0].mxu0 %v80
    %v156 = vpop.f32.mrb[0].mxu0
    %v157 = vadd.f32 %v67, %v156
    %v158 = vpop.f32.mrb[0].mxu0
    %v159 = vpop.f32.mrb[0].mxu0
    %v160 = vadd.f32 %v67, %v159
    %v161 = vpop.f32.mrb[0].mxu0
    %162 = vmatprep.mubr.bf16.mxu0 0
    %163 = vmatmul.mubr.bf16.gmra.mrb[0].mxu0 %v83
    %v164 = vpop.f32.mrb[0].mxu0
    %v165 = vadd.f32 %v67, %v164
    %v166 = vpop.f32.mrb[0].mxu0
    %v167 = vpop.f32.mrb[0].mxu0
    %v168 = vadd.f32 %v67, %v167
    %v169 = vpop.f32.mrb[0].mxu0
    %170 = vmatprep.mubr.bf16.mxu0 0
    %171 = vmatmul.mubr.bf16.gmra.mrb[0].mxu0 %v86
    %v172 = vpop.f32.mrb[0].mxu0
    %v173 = vadd.f32 %v67, %v172
    %v174 = vpop.f32.mrb[0].mxu0
    %v175 = vpop.f32.mrb[0].mxu0
    %v176 = vadd.f32 %v67, %v175
    %v177 = vpop.f32.mrb[0].mxu0
    %178 = vmatprep.mubr.bf16.mxu0 0
    %179 = vmatmul.mubr.bf16.gmra.mrb[0].mxu0 %v89
    %v180 = vpop.f32.mrb[0].mxu0
    %v181 = vadd.f32 %v67, %v180
    %v182 = vpop.f32.mrb[0].mxu0
    %v183 = vpop.f32.mrb[0].mxu0
    %v184 = vadd.f32 %v67, %v183
    %v185 = vpop.f32.mrb[0].mxu0
    %186 = vmatprep.mubr.bf16.mxu0 0
    %187 = vmatmul.mubr.bf16.gmra.mrb[0].mxu0 %v92
    %v188 = vpop.f32.mrb[0].mxu0
    %v189 = vadd.f32 %v67, %v188
    %v190 = vpop.f32.mrb[0].mxu0
    %v191 = vpop.f32.mrb[0].mxu0
    %v192 = vadd.f32 %v67, %v191
    %v193 = vpop.f32.mrb[0].mxu0
    %194 = vdwg.mxu0
    %195 = vst.msk [vmem:[#allocation2] sm:$0xff] %vm69, %v133
    %196 = vst.msk [vmem:[#allocation2 + $0x8] sm:$0xff] %vm69, %v136
    %197 = vst.msk [vmem:[#allocation2 + $0x10] sm:$0xff] %vm69, %v141
    %198 = vst.msk [vmem:[#allocation2 + $0x18] sm:$0xff] %vm69, %v144
    %199 = vst.msk [vmem:[#allocation2 + $0x20] sm:$0xff] %vm69, %v149
    %200 = vst.msk [vmem:[#allocation2 + $0x28] sm:$0xff] %vm69, %v152
    %201 = vst.msk [vmem:[#allocation2 + $0x30] sm:$0xff] %vm69, %v157
    %202 = vst.msk [vmem:[#allocation2 + $0x38] sm:$0xff] %vm69, %v160
    %203 = vst.msk [vmem:[#allocation2 + $0x40] sm:$0xff] %vm69, %v165
    %204 = vst.msk [vmem:[#allocation2 + $0x48] sm:$0xff] %vm69, %v168
    %205 = vst.msk [vmem:[#allocation2 + $0x50] sm:$0xff] %vm69, %v173
    %206 = vst.msk [vmem:[#allocation2 + $0x58] sm:$0xff] %vm69, %v176
    %207 = vst.msk [vmem:[#allocation2 + $0x60] sm:$0xff] %vm69, %v181
    %208 = vst.msk [vmem:[#allocation2 + $0x68] sm:$0xff] %vm69, %v184
    %209 = vst.msk [vmem:[#allocation2 + $0x70] sm:$0xff] %vm69, %v189
    %210 = vst.msk [vmem:[#allocation2 + $0x78] sm:$0xff] %vm69, %v192
    %227 = vrot.lane.b32.xlu0 %v133, 112
    %v228 = vpop.permute.xlu0 %227
    %229 = vrot.lane.b32.xlu0 %v136, 112
    %v230 = vpop.permute.xlu0 %229
    %231 = vrot.lane.b32.xlu0 %v141, 112
    %v232 = vpop.permute.xlu0 %231
    %233 = vrot.lane.b32.xlu0 %v144, 112
    %v234 = vpop.permute.xlu0 %233
    %235 = vrot.lane.b32.xlu0 %v149, 112
    %v236 = vpop.permute.xlu0 %235
    %237 = vrot.lane.b32.xlu0 %v152, 112
    %v238 = vpop.permute.xlu0 %237
    %239 = vrot.lane.b32.xlu0 %v157, 112
    %v240 = vpop.permute.xlu0 %239
    %241 = vrot.lane.b32.xlu0 %v160, 112
    %v242 = vpop.permute.xlu0 %241
    %243 = vrot.lane.b32.xlu0 %v165, 112
    %v244 = vpop.permute.xlu0 %243
    %245 = vrot.lane.b32.xlu0 %v168, 112
    %v246 = vpop.permute.xlu0 %245
    %247 = vrot.lane.b32.xlu0 %v173, 112
    %v248 = vpop.permute.xlu0 %247
    %249 = vrot.lane.b32.xlu0 %v176, 112
    %v250 = vpop.permute.xlu0 %249
    %251 = vrot.lane.b32.xlu0 %v181, 112
    %v252 = vpop.permute.xlu0 %251
    %253 = vrot.lane.b32.xlu0 %v184, 112
    %v254 = vpop.permute.xlu0 %253
    %255 = vrot.lane.b32.xlu0 %v189, 112
    %v256 = vpop.permute.xlu0 %255
    %257 = vrot.lane.b32.xlu0 %v192, 112
    %v258 = vpop.permute.xlu0 %257
    %275 = vst.msk [vmem:[#allocation3] sm:$0xff] %vm69, %v228
    %276 = vst.msk [vmem:[#allocation3 + $0x8] sm:$0xff] %vm69, %v230
    %277 = vst.msk [vmem:[#allocation3 + $0x10] sm:$0xff] %vm69, %v232
    %278 = vst.msk [vmem:[#allocation3 + $0x18] sm:$0xff] %vm69, %v234
    %279 = vst.msk [vmem:[#allocation3 + $0x20] sm:$0xff] %vm69, %v236
    %280 = vst.msk [vmem:[#allocation3 + $0x28] sm:$0xff] %vm69, %v238
    %281 = vst.msk [vmem:[#allocation3 + $0x30] sm:$0xff] %vm69, %v240
    %282 = vst.msk [vmem:[#allocation3 + $0x38] sm:$0xff] %vm69, %v242
    %283 = vst.msk [vmem:[#allocation3 + $0x40] sm:$0xff] %vm69, %v244
    %284 = vst.msk [vmem:[#allocation3 + $0x48] sm:$0xff] %vm69, %v246
    %285 = vst.msk [vmem:[#allocation3 + $0x50] sm:$0xff] %vm69, %v248
    %286 = vst.msk [vmem:[#allocation3 + $0x58] sm:$0xff] %vm69, %v250
    %287 = vst.msk [vmem:[#allocation3 + $0x60] sm:$0xff] %vm69, %v252
    %288 = vst.msk [vmem:[#allocation3 + $0x68] sm:$0xff] %vm69, %v254
    %289 = vst.msk [vmem:[#allocation3 + $0x70] sm:$0xff] %vm69, %v256
    %290 = vst.msk [vmem:[#allocation3 + $0x78] sm:$0xff] %vm69, %v258
    %291 = vrot.lane.b32.xlu0 %v133, 96
    %v292 = vpop.permute.xlu0 %291
    %293 = vrot.lane.b32.xlu0 %v136, 96
    %v294 = vpop.permute.xlu0 %293
    %295 = vrot.lane.b32.xlu0 %v141, 96
    %v296 = vpop.permute.xlu0 %295
    %297 = vrot.lane.b32.xlu0 %v144, 96
    %v298 = vpop.permute.xlu0 %297
    %299 = vrot.lane.b32.xlu0 %v149, 96
    %v300 = vpop.permute.xlu0 %299
    %301 = vrot.lane.b32.xlu0 %v152, 96
    %v302 = vpop.permute.xlu0 %301
    %303 = vrot.lane.b32.xlu0 %v157, 96
    %v304 = vpop.permute.xlu0 %303
    %305 = vrot.lane.b32.xlu0 %v160, 96
    %v306 = vpop.permute.xlu0 %305
    %307 = vrot.lane.b32.xlu0 %v165, 96
    %v308 = vpop.permute.xlu0 %307
    %309 = vrot.lane.b32.xlu0 %v168, 96
    %v310 = vpop.permute.xlu0 %309
    %311 = vrot.lane.b32.xlu0 %v173, 96
    %v312 = vpop.permute.xlu0 %311
    %313 = vrot.lane.b32.xlu0 %v176, 96
    %v314 = vpop.permute.xlu0 %313
    %315 = vrot.lane.b32.xlu0 %v181, 96
    %v316 = vpop.permute.xlu0 %315
    %317 = vrot.lane.b32.xlu0 %v184, 96
    %v318 = vpop.permute.xlu0 %317
    %319 = vrot.lane.b32.xlu0 %v189, 96
    %v320 = vpop.permute.xlu0 %319
    %321 = vrot.lane.b32.xlu0 %v192, 96
    %v322 = vpop.permute.xlu0 %321
    %339 = vst.msk [vmem:[#allocation4] sm:$0xff] %vm69, %v292
    %340 = vst.msk [vmem:[#allocation4 + $0x8] sm:$0xff] %vm69, %v294
    %341 = vst.msk [vmem:[#allocation4 + $0x10] sm:$0xff] %vm69, %v296
    %342 = vst.msk [vmem:[#allocation4 + $0x18] sm:$0xff] %vm69, %v298
    %343 = vst.msk [vmem:[#allocation4 + $0x20] sm:$0xff] %vm69, %v300
    %344 = vst.msk [vmem:[#allocation4 + $0x28] sm:$0xff] %vm69, %v302
    %345 = vst.msk [vmem:[#allocation4 + $0x30] sm:$0xff] %vm69, %v304
    %346 = vst.msk [vmem:[#allocation4 + $0x38] sm:$0xff] %vm69, %v306
    %347 = vst.msk [vmem:[#allocation4 + $0x40] sm:$0xff] %vm69, %v308
    %348 = vst.msk [vmem:[#allocation4 + $0x48] sm:$0xff] %vm69, %v310
    %349 = vst.msk [vmem:[#allocation4 + $0x50] sm:$0xff] %vm69, %v312
    %350 = vst.msk [vmem:[#allocation4 + $0x58] sm:$0xff] %vm69, %v314
    %351 = vst.msk [vmem:[#allocation4 + $0x60] sm:$0xff] %vm69, %v316
    %352 = vst.msk [vmem:[#allocation4 + $0x68] sm:$0xff] %vm69, %v318
    %353 = vst.msk [vmem:[#allocation4 + $0x70] sm:$0xff] %vm69, %v320
    %354 = vst.msk [vmem:[#allocation4 + $0x78] sm:$0xff] %vm69, %v322
    %355 = vrot.lane.b32.xlu0 %v133, 120
    %v356 = vpop.permute.xlu0 %355
    %357 = vrot.lane.b32.xlu0 %v136, 120
    %v358 = vpop.permute.xlu0 %357
    %359 = vrot.lane.b32.xlu0 %v141, 120
    %v360 = vpop.permute.xlu0 %359
    %361 = vrot.lane.b32.xlu0 %v144, 120
    %v362 = vpop.permute.xlu0 %361
    %363 = vrot.lane.b32.xlu0 %v149, 120
    %v364 = vpop.permute.xlu0 %363
    %365 = vrot.lane.b32.xlu0 %v152, 120
    %v366 = vpop.permute.xlu0 %365
    %367 = vrot.lane.b32.xlu0 %v157, 120
    %v368 = vpop.permute.xlu0 %367
    %369 = vrot.lane.b32.xlu0 %v160, 120
    %v370 = vpop.permute.xlu0 %369
    %371 = vrot.lane.b32.xlu0 %v165, 120
    %v372 = vpop.permute.xlu0 %371
    %373 = vrot.lane.b32.xlu0 %v168, 120
    %v374 = vpop.permute.xlu0 %373
    %375 = vrot.lane.b32.xlu0 %v173, 120
    %v376 = vpop.permute.xlu0 %375
    %377 = vrot.lane.b32.xlu0 %v176, 120
    %v378 = vpop.permute.xlu0 %377
    %379 = vrot.lane.b32.xlu0 %v181, 120
    %v380 = vpop.permute.xlu0 %379
    %381 = vrot.lane.b32.xlu0 %v184, 120
    %v382 = vpop.permute.xlu0 %381
    %383 = vrot.lane.b32.xlu0 %v189, 120
    %v384 = vpop.permute.xlu0 %383
    %385 = vrot.lane.b32.xlu0 %v192, 120
    %v386 = vpop.permute.xlu0 %385
    %403 = vst.msk [vmem:[#allocation2 + $0x80] sm:$0xff] %vm69, %v356
    %404 = vst.msk [vmem:[#allocation2 + $0x88] sm:$0xff] %vm69, %v358
    %405 = vst.msk [vmem:[#allocation2 + $0x90] sm:$0xff] %vm69, %v360
    %406 = vst.msk [vmem:[#allocation2 + $0x98] sm:$0xff] %vm69, %v362
    %407 = vst.msk [vmem:[#allocation2 + $0xa0] sm:$0xff] %vm69, %v364
    %408 = vst.msk [vmem:[#allocation2 + $0xa8] sm:$0xff] %vm69, %v366
    %409 = vst.msk [vmem:[#allocation2 + $0xb0] sm:$0xff] %vm69, %v368
    %410 = vst.msk [vmem:[#allocation2 + $0xb8] sm:$0xff] %vm69, %v370
    %411 = vst.msk [vmem:[#allocation2 + $0xc0] sm:$0xff] %vm69, %v372
    %412 = vst.msk [vmem:[#allocation2 + $0xc8] sm:$0xff] %vm69, %v374
    %413 = vst.msk [vmem:[#allocation2 + $0xd0] sm:$0xff] %vm69, %v376
    %414 = vst.msk [vmem:[#allocation2 + $0xd8] sm:$0xff] %vm69, %v378
    %415 = vst.msk [vmem:[#allocation2 + $0xe0] sm:$0xff] %vm69, %v380
    %416 = vst.msk [vmem:[#allocation2 + $0xe8] sm:$0xff] %vm69, %v382
    %417 = vst.msk [vmem:[#allocation2 + $0xf0] sm:$0xff] %vm69, %v384
    %418 = vst.msk [vmem:[#allocation2 + $0xf8] sm:$0xff] %vm69, %v386
    %419 = vrot.lane.b32.xlu0 %v133, 104
    %v420 = vpop.permute.xlu0 %419
    %421 = vrot.lane.b32.xlu0 %v136, 104
    %v422 = vpop.permute.xlu0 %421
    %423 = vrot.lane.b32.xlu0 %v141, 104
    %v424 = vpop.permute.xlu0 %423
    %425 = vrot.lane.b32.xlu0 %v144, 104
    %v426 = vpop.permute.xlu0 %425
    %427 = vrot.lane.b32.xlu0 %v149, 104
    %v428 = vpop.permute.xlu0 %427
    %429 = vrot.lane.b32.xlu0 %v152, 104
    %v430 = vpop.permute.xlu0 %429
    %431 = vrot.lane.b32.xlu0 %v157, 104
    %v432 = vpop.permute.xlu0 %431
    %433 = vrot.lane.b32.xlu0 %v160, 104
    %v434 = vpop.permute.xlu0 %433
    %435 = vrot.lane.b32.xlu0 %v165, 104
    %v436 = vpop.permute.xlu0 %435
    %437 = vrot.lane.b32.xlu0 %v168, 104
    %v438 = vpop.permute.xlu0 %437
    %439 = vrot.lane.b32.xlu0 %v173, 104
    %v440 = vpop.permute.xlu0 %439
    %441 = vrot.lane.b32.xlu0 %v176, 104
    %v442 = vpop.permute.xlu0 %441
    %443 = vrot.lane.b32.xlu0 %v181, 104
    %v444 = vpop.permute.xlu0 %443
    %445 = vrot.lane.b32.xlu0 %v184, 104
    %v446 = vpop.permute.xlu0 %445
    %447 = vrot.lane.b32.xlu0 %v189, 104
    %v448 = vpop.permute.xlu0 %447
    %449 = vrot.lane.b32.xlu0 %v192, 104
    %v450 = vpop.permute.xlu0 %449
    %467 = vst.msk [vmem:[#allocation3 + $0x80] sm:$0xff] %vm69, %v420
    %468 = vst.msk [vmem:[#allocation3 + $0x88] sm:$0xff] %vm69, %v422
    %469 = vst.msk [vmem:[#allocation3 + $0x90] sm:$0xff] %vm69, %v424
    %470 = vst.msk [vmem:[#allocation3 + $0x98] sm:$0xff] %vm69, %v426
    %471 = vst.msk [vmem:[#allocation3 + $0xa0] sm:$0xff] %vm69, %v428
    %472 = vst.msk [vmem:[#allocation3 + $0xa8] sm:$0xff] %vm69, %v430
    %473 = vst.msk [vmem:[#allocation3 + $0xb0] sm:$0xff] %vm69, %v432
    %474 = vst.msk [vmem:[#allocation3 + $0xb8] sm:$0xff] %vm69, %v434
    %475 = vst.msk [vmem:[#allocation3 + $0xc0] sm:$0xff] %vm69, %v436
    %476 = vst.msk [vmem:[#allocation3 + $0xc8] sm:$0xff] %vm69, %v438
    %477 = vst.msk [vmem:[#allocation3 + $0xd0] sm:$0xff] %vm69, %v440
    %478 = vst.msk [vmem:[#allocation3 + $0xd8] sm:$0xff] %vm69, %v442
    %479 = vst.msk [vmem:[#allocation3 + $0xe0] sm:$0xff] %vm69, %v444
    %480 = vst.msk [vmem:[#allocation3 + $0xe8] sm:$0xff] %vm69, %v446
    %481 = vst.msk [vmem:[#allocation3 + $0xf0] sm:$0xff] %vm69, %v448
    %482 = vst.msk [vmem:[#allocation3 + $0xf8] sm:$0xff] %vm69, %v450
    %483 = vrot.lane.b32.xlu0 %v133, 88
    %v484 = vpop.permute.xlu0 %483
    %485 = vrot.lane.b32.xlu0 %v136, 88
    %v486 = vpop.permute.xlu0 %485
    %487 = vrot.lane.b32.xlu0 %v141, 88
    %v488 = vpop.permute.xlu0 %487
    %489 = vrot.lane.b32.xlu0 %v144, 88
    %v490 = vpop.permute.xlu0 %489
    %491 = vrot.lane.b32.xlu0 %v149, 88
    %v492 = vpop.permute.xlu0 %491
    %493 = vrot.lane.b32.xlu0 %v152, 88
    %v494 = vpop.permute.xlu0 %493
    %495 = vrot.lane.b32.xlu0 %v157, 88
    %v496 = vpop.permute.xlu0 %495
    %497 = vrot.lane.b32.xlu0 %v160, 88
    %v498 = vpop.permute.xlu0 %497
    %499 = vrot.lane.b32.xlu0 %v165, 88
    %v500 = vpop.permute.xlu0 %499
    %501 = vrot.lane.b32.xlu0 %v168, 88
    %v502 = vpop.permute.xlu0 %501
    %503 = vrot.lane.b32.xlu0 %v173, 88
    %v504 = vpop.permute.xlu0 %503
    %505 = vrot.lane.b32.xlu0 %v176, 88
    %v506 = vpop.permute.xlu0 %505
    %507 = vrot.lane.b32.xlu0 %v181, 88
    %v508 = vpop.permute.xlu0 %507
    %509 = vrot.lane.b32.xlu0 %v184, 88
    %v510 = vpop.permute.xlu0 %509
    %511 = vrot.lane.b32.xlu0 %v189, 88
    %v512 = vpop.permute.xlu0 %511
    %513 = vrot.lane.b32.xlu0 %v192, 88
    %v514 = vpop.permute.xlu0 %513
    %531 = vst.msk [vmem:[#allocation4 + $0x80] sm:$0xff] %vm69, %v484
    %532 = vst.msk [vmem:[#allocation4 + $0x88] sm:$0xff] %vm69, %v486
    %533 = vst.msk [vmem:[#allocation4 + $0x90] sm:$0xff] %vm69, %v488
    %534 = vst.msk [vmem:[#allocation4 + $0x98] sm:$0xff] %vm69, %v490
    %535 = vst.msk [vmem:[#allocation4 + $0xa0] sm:$0xff] %vm69, %v492
    %536 = vst.msk [vmem:[#allocation4 + $0xa8] sm:$0xff] %vm69, %v494
    %537 = vst.msk [vmem:[#allocation4 + $0xb0] sm:$0xff] %vm69, %v496
    %538 = vst.msk [vmem:[#allocation4 + $0xb8] sm:$0xff] %vm69, %v498
    %539 = vst.msk [vmem:[#allocation4 + $0xc0] sm:$0xff] %vm69, %v500
    %540 = vst.msk [vmem:[#allocation4 + $0xc8] sm:$0xff] %vm69, %v502
    %541 = vst.msk [vmem:[#allocation4 + $0xd0] sm:$0xff] %vm69, %v504
    %542 = vst.msk [vmem:[#allocation4 + $0xd8] sm:$0xff] %vm69, %v506
    %543 = vst.msk [vmem:[#allocation4 + $0xe0] sm:$0xff] %vm69, %v508
    %544 = vst.msk [vmem:[#allocation4 + $0xe8] sm:$0xff] %vm69, %v510
    %545 = vst.msk [vmem:[#allocation4 + $0xf0] sm:$0xff] %vm69, %v512
    %546 = vst.msk [vmem:[#allocation4 + $0xf8] sm:$0xff] %vm69, %v514
    %v547 = vld [vmem:[#allocation2] sm:$0xff]
    %v548 = vld [vmem:[#allocation2 + $0x8] sm:$0xff]
    %v549 = vld [vmem:[#allocation2 + $0x10] sm:$0xff]
    %v550 = vld [vmem:[#allocation2 + $0x18] sm:$0xff]
    %v551 = vld [vmem:[#allocation2 + $0x20] sm:$0xff]
    %v552 = vld [vmem:[#allocation2 + $0x28] sm:$0xff]
    %v553 = vld [vmem:[#allocation2 + $0x30] sm:$0xff]
    %v554 = vld [vmem:[#allocation2 + $0x38] sm:$0xff]
    %v555 = vld [vmem:[#allocation2 + $0x40] sm:$0xff]
    %v556 = vld [vmem:[#allocation2 + $0x48] sm:$0xff]
    %v557 = vld [vmem:[#allocation2 + $0x50] sm:$0xff]
    %v558 = vld [vmem:[#allocation2 + $0x58] sm:$0xff]
    %v559 = vld [vmem:[#allocation2 + $0x60] sm:$0xff]
    %v560 = vld [vmem:[#allocation2 + $0x68] sm:$0xff]
    %v561 = vld [vmem:[#allocation2 + $0x70] sm:$0xff]
    %v562 = vld [vmem:[#allocation2 + $0x78] sm:$0xff]
    %v563 = vld [vmem:[#allocation2 + $0x80] sm:$0xff]
    %v564 = vld [vmem:[#allocation2 + $0x88] sm:$0xff]
    %v565 = vld [vmem:[#allocation2 + $0x90] sm:$0xff]
    %v566 = vld [vmem:[#allocation2 + $0x98] sm:$0xff]
    %v567 = vld [vmem:[#allocation2 + $0xa0] sm:$0xff]
    %v568 = vld [vmem:[#allocation2 + $0xa8] sm:$0xff]
    %v569 = vld [vmem:[#allocation2 + $0xb0] sm:$0xff]
    %v570 = vld [vmem:[#allocation2 + $0xb8] sm:$0xff]
    %v571 = vld [vmem:[#allocation2 + $0xc0] sm:$0xff]
    %v572 = vld [vmem:[#allocation2 + $0xc8] sm:$0xff]
    %v573 = vld [vmem:[#allocation2 + $0xd0] sm:$0xff]
    %v574 = vld [vmem:[#allocation2 + $0xd8] sm:$0xff]
    %v575 = vld [vmem:[#allocation2 + $0xe0] sm:$0xff]
    %v576 = vld [vmem:[#allocation2 + $0xe8] sm:$0xff]
    %v577 = vld [vmem:[#allocation2 + $0xf0] sm:$0xff]
    %v578 = vld [vmem:[#allocation2 + $0xf8] sm:$0xff]
    %v579 = vpack.c.bf16 %v548, %v547
    %v580 = vpack.c.bf16 %v550, %v549
    %v581 = vpack.c.bf16 %v552, %v551
    %v582 = vpack.c.bf16 %v554, %v553
    %v583 = vpack.c.bf16 %v556, %v555
    %v584 = vpack.c.bf16 %v558, %v557
    %v585 = vpack.c.bf16 %v560, %v559
    %v586 = vpack.c.bf16 %v562, %v561
    %v587 = vpack.c.bf16 %v564, %v563
    %v588 = vpack.c.bf16 %v566, %v565
    %v589 = vpack.c.bf16 %v568, %v567
    %v590 = vpack.c.bf16 %v570, %v569
    %v591 = vpack.c.bf16 %v572, %v571
    %v592 = vpack.c.bf16 %v574, %v573
    %v593 = vpack.c.bf16 %v576, %v575
    %v594 = vpack.c.bf16 %v578, %v577
    %v595 = vld [vmem:[#allocation3] sm:$0xff]
    %v596 = vld [vmem:[#allocation3 + $0x8] sm:$0xff]
    %v597 = vld [vmem:[#allocation3 + $0x10] sm:$0xff]
    %v598 = vld [vmem:[#allocation3 + $0x18] sm:$0xff]
    %v599 = vld [vmem:[#allocation3 + $0x20] sm:$0xff]
    %v600 = vld [vmem:[#allocation3 + $0x28] sm:$0xff]
    %v601 = vld [vmem:[#allocation3 + $0x30] sm:$0xff]
    %v602 = vld [vmem:[#allocation3 + $0x38] sm:$0xff]
    %v603 = vld [vmem:[#allocation3 + $0x40] sm:$0xff]
    %v604 = vld [vmem:[#allocation3 + $0x48] sm:$0xff]
    %v605 = vld [vmem:[#allocation3 + $0x50] sm:$0xff]
    %v606 = vld [vmem:[#allocation3 + $0x58] sm:$0xff]
    %v607 = vld [vmem:[#allocation3 + $0x60] sm:$0xff]
    %v608 = vld [vmem:[#allocation3 + $0x68] sm:$0xff]
    %v609 = vld [vmem:[#allocation3 + $0x70] sm:$0xff]
    %v610 = vld [vmem:[#allocation3 + $0x78] sm:$0xff]
    %v611 = vld [vmem:[#allocation3 + $0x80] sm:$0xff]
    %v612 = vld [vmem:[#allocation3 + $0x88] sm:$0xff]
    %v613 = vld [vmem:[#allocation3 + $0x90] sm:$0xff]
    %v614 = vld [vmem:[#allocation3 + $0x98] sm:$0xff]
    %v615 = vld [vmem:[#allocation3 + $0xa0] sm:$0xff]
    %v616 = vld [vmem:[#allocation3 + $0xa8] sm:$0xff]
    %v617 = vld [vmem:[#allocation3 + $0xb0] sm:$0xff]
    %v618 = vld [vmem:[#allocation3 + $0xb8] sm:$0xff]
    %v619 = vld [vmem:[#allocation3 + $0xc0] sm:$0xff]
    %v620 = vld [vmem:[#allocation3 + $0xc8] sm:$0xff]
    %v621 = vld [vmem:[#allocation3 + $0xd0] sm:$0xff]
    %v622 = vld [vmem:[#allocation3 + $0xd8] sm:$0xff]
    %v623 = vld [vmem:[#allocation3 + $0xe0] sm:$0xff]
    %v624 = vld [vmem:[#allocation3 + $0xe8] sm:$0xff]
    %v625 = vld [vmem:[#allocation3 + $0xf0] sm:$0xff]
    %v626 = vld [vmem:[#allocation3 + $0xf8] sm:$0xff]
    %v627 = vpack.c.bf16 %v596, %v595
    %v628 = vpack.c.bf16 %v598, %v597
    %v629 = vpack.c.bf16 %v600, %v599
    %v630 = vpack.c.bf16 %v602, %v601
    %v631 = vpack.c.bf16 %v604, %v603
    %v632 = vpack.c.bf16 %v606, %v605
    %v633 = vpack.c.bf16 %v608, %v607
    %v634 = vpack.c.bf16 %v610, %v609
    %v635 = vpack.c.bf16 %v612, %v611
    %v636 = vpack.c.bf16 %v614, %v613
    %v637 = vpack.c.bf16 %v616, %v615
    %v638 = vpack.c.bf16 %v618, %v617
    %v639 = vpack.c.bf16 %v620, %v619
    %v640 = vpack.c.bf16 %v622, %v621
    %v641 = vpack.c.bf16 %v624, %v623
    %v642 = vpack.c.bf16 %v626, %v625
    %v643 = vld [vmem:[#allocation4] sm:$0xff]
    %v644 = vld [vmem:[#allocation4 + $0x8] sm:$0xff]
    %v645 = vld [vmem:[#allocation4 + $0x10] sm:$0xff]
    %v646 = vld [vmem:[#allocation4 + $0x18] sm:$0xff]
    %v647 = vld [vmem:[#allocation4 + $0x20] sm:$0xff]
    %v648 = vld [vmem:[#allocation4 + $0x28] sm:$0xff]
    %v649 = vld [vmem:[#allocation4 + $0x30] sm:$0xff]
    %v650 = vld [vmem:[#allocation4 + $0x38] sm:$0xff]
    %v651 = vld [vmem:[#allocation4 + $0x40] sm:$0xff]
    %v652 = vld [vmem:[#allocation4 + $0x48] sm:$0xff]
    %v653 = vld [vmem:[#allocation4 + $0x50] sm:$0xff]
    %v654 = vld [vmem:[#allocation4 + $0x58] sm:$0xff]
    %v655 = vld [vmem:[#allocation4 + $0x60] sm:$0xff]
    %v656 = vld [vmem:[#allocation4 + $0x68] sm:$0xff]
    %v657 = vld [vmem:[#allocation4 + $0x70] sm:$0xff]
    %v658 = vld [vmem:[#allocation4 + $0x78] sm:$0xff]
    %v659 = vld [vmem:[#allocation4 + $0x80] sm:$0xff]
    %v660 = vld [vmem:[#allocation4 + $0x88] sm:$0xff]
    %v661 = vld [vmem:[#allocation4 + $0x90] sm:$0xff]
    %v662 = vld [vmem:[#allocation4 + $0x98] sm:$0xff]
    %v663 = vld [vmem:[#allocation4 + $0xa0] sm:$0xff]
    %v664 = vld [vmem:[#allocation4 + $0xa8] sm:$0xff]
    %v665 = vld [vmem:[#allocation4 + $0xb0] sm:$0xff]
    %v666 = vld [vmem:[#allocation4 + $0xb8] sm:$0xff]
    %v667 = vld [vmem:[#allocation4 + $0xc0] sm:$0xff]
    %v668 = vld [vmem:[#allocation4 + $0xc8] sm:$0xff]
    %v669 = vld [vmem:[#allocation4 + $0xd0] sm:$0xff]
    %v670 = vld [vmem:[#allocation4 + $0xd8] sm:$0xff]
    %v671 = vld [vmem:[#allocation4 + $0xe0] sm:$0xff]
    %v672 = vld [vmem:[#allocation4 + $0xe8] sm:$0xff]
    %v673 = vld [vmem:[#allocation4 + $0xf0] sm:$0xff]
    %v674 = vld [vmem:[#allocation4 + $0xf8] sm:$0xff]
    %v675 = vpack.c.bf16 %v644, %v643
    %v676 = vpack.c.bf16 %v646, %v645
    %v677 = vpack.c.bf16 %v648, %v647
    %v678 = vpack.c.bf16 %v650, %v649
    %v679 = vpack.c.bf16 %v652, %v651
    %v680 = vpack.c.bf16 %v654, %v653
    %v681 = vpack.c.bf16 %v656, %v655
    %v682 = vpack.c.bf16 %v658, %v657
    %v683 = vpack.c.bf16 %v660, %v659
    %v684 = vpack.c.bf16 %v662, %v661
    %v685 = vpack.c.bf16 %v664, %v663
    %v686 = vpack.c.bf16 %v666, %v665
    %v687 = vpack.c.bf16 %v668, %v667
    %v688 = vpack.c.bf16 %v670, %v669
    %v689 = vpack.c.bf16 %v672, %v671
    %v690 = vpack.c.bf16 %v674, %v673
    %v692 = vsel %vm69, %v579, 0
    %v695 = vsel %vm69, %v580, 0
    %v698 = vsel %vm69, %v581, 0
    %v701 = vsel %vm69, %v582, 0
    %v704 = vsel %vm69, %v583, 0
    %v707 = vsel %vm69, %v584, 0
    %v710 = vsel %vm69, %v585, 0
    %v713 = vsel %vm69, %v586, 0
    %v716 = vsel %vm69, %v587, 0
    %v719 = vsel %vm69, %v588, 0
    %v722 = vsel %vm69, %v589, 0
    %v725 = vsel %vm69, %v590, 0
    %v728 = vsel %vm69, %v591, 0
    %v731 = vsel %vm69, %v592, 0
    %v734 = vsel %vm69, %v593, 0
    %v737 = vsel %vm69, %v594, 0
    %v740 = vsel %vm69, %v627, 0
    %v743 = vsel %vm69, %v628, 0
    %v746 = vsel %vm69, %v629, 0
    %v749 = vsel %vm69, %v630, 0
    %v752 = vsel %vm69, %v631, 0
    %v755 = vsel %vm69, %v632, 0
    %v758 = vsel %vm69, %v633, 0
    %v761 = vsel %vm69, %v634, 0
    %v764 = vsel %vm69, %v635, 0
    %v767 = vsel %vm69, %v636, 0
    %v770 = vsel %vm69, %v637, 0
    %v773 = vsel %vm69, %v638, 0
    %v776 = vsel %vm69, %v639, 0
    %v779 = vsel %vm69, %v640, 0
    %v782 = vsel %vm69, %v641, 0
    %v785 = vsel %vm69, %v642, 0
    %787 = vmatprep.subr.bf16.mxu0 0
    %788 = vmatpush1.bf16.xpose.msra.mxu0 %v740
    %789 = vmatprep.subr.bf16.mxu0 0
    %790 = vmatpush1.bf16.xpose.msra.mxu0 %v743
    %791 = vmatprep.subr.bf16.mxu0 0
    %792 = vmatpush1.bf16.xpose.msra.mxu0 %v746
    %793 = vmatprep.subr.bf16.mxu0 0
    %794 = vmatpush1.bf16.xpose.msra.mxu0 %v749
    %795 = vmatprep.subr.bf16.mxu0 0
    %796 = vmatpush1.bf16.xpose.msra.mxu0 %v752
    %797 = vmatprep.subr.bf16.mxu0 0
    %798 = vmatpush1.bf16.xpose.msra.mxu0 %v755
    %799 = vmatprep.subr.bf16.mxu0 0
    %800 = vmatpush1.bf16.xpose.msra.mxu0 %v758
    %801 = vmatprep.subr.bf16.mxu0 0
    %802 = vmatpush1.bf16.xpose.msra.mxu0 %v761
    %803 = vmatprep.subr.bf16.mxu0 0
    %804 = vmatpush1.bf16.xpose.msra.mxu0 %v764
    %805 = vmatprep.subr.bf16.mxu0 0
    %806 = vmatpush1.bf16.xpose.msra.mxu0 %v767
    %807 = vmatprep.subr.bf16.mxu0 0
    %808 = vmatpush1.bf16.xpose.msra.mxu0 %v770
    %809 = vmatprep.subr.bf16.mxu0 0
    %810 = vmatpush1.bf16.xpose.msra.mxu0 %v773
    %811 = vmatprep.subr.bf16.mxu0 0
    %812 = vmatpush1.bf16.xpose.msra.mxu0 %v776
    %813 = vmatprep.subr.bf16.mxu0 0
    %814 = vmatpush1.bf16.xpose.msra.mxu0 %v779
    %815 = vmatprep.subr.bf16.mxu0 0
    %816 = vmatpush1.bf16.xpose.msra.mxu0 %v782
    %817 = vmatprep.subr.bf16.mxu0 0
    %818 = vmatpush1.bf16.xpose.msra.mxu0 %v785
    %819 = vmatprep.mubr.bf16.mxu0 0
    %820 = vmatmul.mubr.bf16.gmra.mrb[0].mxu0 %v692
    %v821 = vpop.f32.mrb[0].mxu0
    %v822 = vadd.f32 0.0, %v821
    %v823 = vpop.f32.mrb[0].mxu0
    %v824 = vadd.f32 0.0, %v823
    %v825 = vpop.f32.mrb[0].mxu0
    %v826 = vadd.f32 0.0, %v825
    %v827 = vpop.f32.mrb[0].mxu0
    %v828 = vadd.f32 0.0, %v827
    %829 = vmatprep.mubr.bf16.mxu0 0
    %830 = vmatmul.mubr.bf16.gmra.mrb[0].mxu0 %v695
    %v831 = vpop.f32.mrb[0].mxu0
    %v832 = vadd.f32 0.0, %v831
    %v833 = vpop.f32.mrb[0].mxu0
    %v834 = vadd.f32 0.0, %v833
    %v835 = vpop.f32.mrb[0].mxu0
    %v836 = vadd.f32 0.0, %v835
    %v837 = vpop.f32.mrb[0].mxu0
    %v838 = vadd.f32 0.0, %v837
    %839 = vmatprep.mubr.bf16.mxu0 0
    %840 = vmatmul.mubr.bf16.gmra.mrb[0].mxu0 %v698
    %v841 = vpop.f32.mrb[0].mxu0
    %v842 = vadd.f32 0.0, %v841
    %v843 = vpop.f32.mrb[0].mxu0
    %v844 = vadd.f32 0.0, %v843
    %v845 = vpop.f32.mrb[0].mxu0
    %v846 = vadd.f32 0.0, %v845
    %v847 = vpop.f32.mrb[0].mxu0
    %v848 = vadd.f32 0.0, %v847
    %849 = vmatprep.mubr.bf16.mxu0 0
    %850 = vmatmul.mubr.bf16.gmra.mrb[0].mxu0 %v701
    %v851 = vpop.f32.mrb[0].mxu0
    %v852 = vadd.f32 0.0, %v851
    %v853 = vpop.f32.mrb[0].mxu0
    %v854 = vadd.f32 0.0, %v853
    %v855 = vpop.f32.mrb[0].mxu0
    %v856 = vadd.f32 0.0, %v855
    %v857 = vpop.f32.mrb[0].mxu0
    %v858 = vadd.f32 0.0, %v857
    %859 = vmatprep.mubr.bf16.mxu0 0
    %860 = vmatmul.mubr.bf16.gmra.mrb[0].mxu0 %v704
    %v861 = vpop.f32.mrb[0].mxu0
    %v862 = vadd.f32 0.0, %v861
    %v863 = vpop.f32.mrb[0].mxu0
    %v864 = vadd.f32 0.0, %v863
    %v865 = vpop.f32.mrb[0].mxu0
    %v866 = vadd.f32 0.0, %v865
    %v867 = vpop.f32.mrb[0].mxu0
    %v868 = vadd.f32 0.0, %v867
    %869 = vmatprep.mubr.bf16.mxu0 0
    %870 = vmatmul.mubr.bf16.gmra.mrb[0].mxu0 %v707
    %v871 = vpop.f32.mrb[0].mxu0
    %v872 = vadd.f32 0.0, %v871
    %v873 = vpop.f32.mrb[0].mxu0
    %v874 = vadd.f32 0.0, %v873
    %v875 = vpop.f32.mrb[0].mxu0
    %v876 = vadd.f32 0.0, %v875
    %v877 = vpop.f32.mrb[0].mxu0
    %v878 = vadd.f32 0.0, %v877
    %879 = vmatprep.mubr.bf16.mxu0 0
    %880 = vmatmul.mubr.bf16.gmra.mrb[0].mxu0 %v710
    %v881 = vpop.f32.mrb[0].mxu0
    %v882 = vadd.f32 0.0, %v881
    %v883 = vpop.f32.mrb[0].mxu0
    %v884 = vadd.f32 0.0, %v883
    %v885 = vpop.f32.mrb[0].mxu0
    %v886 = vadd.f32 0.0, %v885
    %v887 = vpop.f32.mrb[0].mxu0
    %v888 = vadd.f32 0.0, %v887
    %889 = vmatprep.mubr.bf16.mxu0 0
    %890 = vmatmul.mubr.bf16.gmra.mrb[0].mxu0 %v713
    %v891 = vpop.f32.mrb[0].mxu0
    %v892 = vadd.f32 0.0, %v891
    %v893 = vpop.f32.mrb[0].mxu0
    %v894 = vadd.f32 0.0, %v893
    %v895 = vpop.f32.mrb[0].mxu0
    %v896 = vadd.f32 0.0, %v895
    %v897 = vpop.f32.mrb[0].mxu0
    %v898 = vadd.f32 0.0, %v897
    %899 = vmatprep.mubr.bf16.mxu0 0
    %900 = vmatmul.mubr.bf16.gmra.mrb[0].mxu0 %v716
    %v901 = vpop.f32.mrb[0].mxu0
    %v902 = vadd.f32 0.0, %v901
    %v903 = vpop.f32.mrb[0].mxu0
    %v904 = vadd.f32 0.0, %v903
    %v905 = vpop.f32.mrb[0].mxu0
    %v906 = vadd.f32 0.0, %v905
    %v907 = vpop.f32.mrb[0].mxu0
    %v908 = vadd.f32 0.0, %v907
    %909 = vmatprep.mubr.bf16.mxu0 0
    %910 = vmatmul.mubr.bf16.gmra.mrb[0].mxu0 %v719
    %v911 = vpop.f32.mrb[0].mxu0
    %v912 = vadd.f32 0.0, %v911
    %v913 = vpop.f32.mrb[0].mxu0
    %v914 = vadd.f32 0.0, %v913
    %v915 = vpop.f32.mrb[0].mxu0
    %v916 = vadd.f32 0.0, %v915
    %v917 = vpop.f32.mrb[0].mxu0
    %v918 = vadd.f32 0.0, %v917
    %919 = vmatprep.mubr.bf16.mxu0 0
    %920 = vmatmul.mubr.bf16.gmra.mrb[0].mxu0 %v722
    %v921 = vpop.f32.mrb[0].mxu0
    %v922 = vadd.f32 0.0, %v921
    %v923 = vpop.f32.mrb[0].mxu0
    %v924 = vadd.f32 0.0, %v923
    %v925 = vpop.f32.mrb[0].mxu0
    %v926 = vadd.f32 0.0, %v925
    %v927 = vpop.f32.mrb[0].mxu0
    %v928 = vadd.f32 0.0, %v927
    %929 = vmatprep.mubr.bf16.mxu0 0
    %930 = vmatmul.mubr.bf16.gmra.mrb[0].mxu0 %v725
    %v931 = vpop.f32.mrb[0].mxu0
    %v932 = vadd.f32 0.0, %v931
    %v933 = vpop.f32.mrb[0].mxu0
    %v934 = vadd.f32 0.0, %v933
    %v935 = vpop.f32.mrb[0].mxu0
    %v936 = vadd.f32 0.0, %v935
    %v937 = vpop.f32.mrb[0].mxu0
    %v938 = vadd.f32 0.0, %v937
    %939 = vmatprep.mubr.bf16.mxu0 0
    %940 = vmatmul.mubr.bf16.gmra.mrb[0].mxu0 %v728
    %v941 = vpop.f32.mrb[0].mxu0
    %v942 = vadd.f32 0.0, %v941
    %v943 = vpop.f32.mrb[0].mxu0
    %v944 = vadd.f32 0.0, %v943
    %v945 = vpop.f32.mrb[0].mxu0
    %v946 = vadd.f32 0.0, %v945
    %v947 = vpop.f32.mrb[0].mxu0
    %v948 = vadd.f32 0.0, %v947
    %949 = vmatprep.mubr.bf16.mxu0 0
    %950 = vmatmul.mubr.bf16.gmra.mrb[0].mxu0 %v731
    %v951 = vpop.f32.mrb[0].mxu0
    %v952 = vadd.f32 0.0, %v951
    %v953 = vpop.f32.mrb[0].mxu0
    %v954 = vadd.f32 0.0, %v953
    %v955 = vpop.f32.mrb[0].mxu0
    %v956 = vadd.f32 0.0, %v955
    %v957 = vpop.f32.mrb[0].mxu0
    %v958 = vadd.f32 0.0, %v957
    %959 = vmatprep.mubr.bf16.mxu0 0
    %960 = vmatmul.mubr.bf16.gmra.mrb[0].mxu0 %v734
    %v961 = vpop.f32.mrb[0].mxu0
    %v962 = vadd.f32 0.0, %v961
    %v963 = vpop.f32.mrb[0].mxu0
    %v964 = vadd.f32 0.0, %v963
    %v965 = vpop.f32.mrb[0].mxu0
    %v966 = vadd.f32 0.0, %v965
    %v967 = vpop.f32.mrb[0].mxu0
    %v968 = vadd.f32 0.0, %v967
    %969 = vmatprep.mubr.bf16.mxu0 0
    %970 = vmatmul.mubr.bf16.gmra.mrb[0].mxu0 %v737
    %v971 = vpop.f32.mrb[0].mxu0
    %v972 = vadd.f32 0.0, %v971
    %v973 = vpop.f32.mrb[0].mxu0
    %v974 = vadd.f32 0.0, %v973
    %v975 = vpop.f32.mrb[0].mxu0
    %v976 = vadd.f32 0.0, %v975
    %v977 = vpop.f32.mrb[0].mxu0
    %v978 = vadd.f32 0.0, %v977
    %979 = vdwg.mxu0
    %v980 = vmax.f32 %v822, %v824
    %981 = vmax.xlane.f32.xlu0 %v980
    %v982 = vpop.xlane.xlu0 %981
    %v983 = vmax.f32 %v826, %v828
    %984 = vmax.xlane.f32.xlu0 %v983
    %v985 = vpop.xlane.xlu0 %984
    %v986 = vmax.f32 %v832, %v834
    %987 = vmax.xlane.f32.xlu0 %v986
    %v988 = vpop.xlane.xlu0 %987
    %v989 = vmax.f32 %v836, %v838
    %990 = vmax.xlane.f32.xlu0 %v989
    %v991 = vpop.xlane.xlu0 %990
    %v992 = vmax.f32 %v842, %v844
    %993 = vmax.xlane.f32.xlu0 %v992
    %v994 = vpop.xlane.xlu0 %993
    %v995 = vmax.f32 %v846, %v848
    %996 = vmax.xlane.f32.xlu0 %v995
    %v997 = vpop.xlane.xlu0 %996
    %v998 = vmax.f32 %v852, %v854
    %999 = vmax.xlane.f32.xlu0 %v998
    %v1000 = vpop.xlane.xlu0 %999
    %v1001 = vmax.f32 %v856, %v858
    %1002 = vmax.xlane.f32.xlu0 %v1001
    %v1003 = vpop.xlane.xlu0 %1002
    %v1004 = vmax.f32 %v862, %v864
    %1005 = vmax.xlane.f32.xlu0 %v1004
    %v1006 = vpop.xlane.xlu0 %1005
    %v1007 = vmax.f32 %v866, %v868
    %1008 = vmax.xlane.f32.xlu0 %v1007
    %v1009 = vpop.xlane.xlu0 %1008
    %v1010 = vmax.f32 %v872, %v874
    %1011 = vmax.xlane.f32.xlu0 %v1010
    %v1012 = vpop.xlane.xlu0 %1011
    %v1013 = vmax.f32 %v876, %v878
    %1014 = vmax.xlane.f32.xlu0 %v1013
    %v1015 = vpop.xlane.xlu0 %1014
    %v1016 = vmax.f32 %v882, %v884
    %1017 = vmax.xlane.f32.xlu0 %v1016
    %v1018 = vpop.xlane.xlu0 %1017
    %v1019 = vmax.f32 %v886, %v888
    %1020 = vmax.xlane.f32.xlu0 %v1019
    %v1021 = vpop.xlane.xlu0 %1020
    %v1022 = vmax.f32 %v892, %v894
    %1023 = vmax.xlane.f32.xlu0 %v1022
    %v1024 = vpop.xlane.xlu0 %1023
    %v1025 = vmax.f32 %v896, %v898
    %1026 = vmax.xlane.f32.xlu0 %v1025
    %v1027 = vpop.xlane.xlu0 %1026
    %v1028 = vmax.f32 %v902, %v904
    %1029 = vmax.xlane.f32.xlu0 %v1028
    %v1030 = vpop.xlane.xlu0 %1029
    %v1031 = vmax.f32 %v906, %v908
    %1032 = vmax.xlane.f32.xlu0 %v1031
    %v1033 = vpop.xlane.xlu0 %1032
    %v1034 = vmax.f32 %v912, %v914
    %1035 = vmax.xlane.f32.xlu0 %v1034
    %v1036 = vpop.xlane.xlu0 %1035
    %v1037 = vmax.f32 %v916, %v918
    %1038 = vmax.xlane.f32.xlu0 %v1037
    %v1039 = vpop.xlane.xlu0 %1038
    %v1040 = vmax.f32 %v922, %v924
    %1041 = vmax.xlane.f32.xlu0 %v1040
    %v1042 = vpop.xlane.xlu0 %1041
    %v1043 = vmax.f32 %v926, %v928
    %1044 = vmax.xlane.f32.xlu0 %v1043
    %v1045 = vpop.xlane.xlu0 %1044
    %v1046 = vmax.f32 %v932, %v934
    %1047 = vmax.xlane.f32.xlu0 %v1046
    %v1048 = vpop.xlane.xlu0 %1047
    %v1049 = vmax.f32 %v936, %v938
    %1050 = vmax.xlane.f32.xlu0 %v1049
    %v1051 = vpop.xlane.xlu0 %1050
    %v1052 = vmax.f32 %v942, %v944
    %1053 = vmax.xlane.f32.xlu0 %v1052
    %v1054 = vpop.xlane.xlu0 %1053
    %v1055 = vmax.f32 %v946, %v948
    %1056 = vmax.xlane.f32.xlu0 %v1055
    %v1057 = vpop.xlane.xlu0 %1056
    %v1058 = vmax.f32 %v952, %v954
    %1059 = vmax.xlane.f32.xlu0 %v1058
    %v1060 = vpop.xlane.xlu0 %1059
    %v1061 = vmax.f32 %v956, %v958
    %1062 = vmax.xlane.f32.xlu0 %v1061
    %v1063 = vpop.xlane.xlu0 %1062
    %v1064 = vmax.f32 %v962, %v964
    %1065 = vmax.xlane.f32.xlu0 %v1064
    %v1066 = vpop.xlane.xlu0 %1065
    %v1067 = vmax.f32 %v966, %v968
    %1068 = vmax.xlane.f32.xlu0 %v1067
    %v1069 = vpop.xlane.xlu0 %1068
    %v1070 = vmax.f32 %v972, %v974
    %1071 = vmax.xlane.f32.xlu0 %v1070
    %v1072 = vpop.xlane.xlu0 %1071
    %v1073 = vmax.f32 %v976, %v978
    %1074 = vmax.xlane.f32.xlu0 %v1073
    %v1075 = vpop.xlane.xlu0 %1074
    %v1076 = vsub.f32 %v822, %v982
    %v1077 = vsub.f32 %v824, %v982
    %v1078 = vsub.f32 %v826, %v985
    %v1079 = vsub.f32 %v828, %v985
    %v1080 = vsub.f32 %v832, %v988
    %v1081 = vsub.f32 %v834, %v988
    %v1082 = vsub.f32 %v836, %v991
    %v1083 = vsub.f32 %v838, %v991
    %v1084 = vsub.f32 %v842, %v994
    %v1085 = vsub.f32 %v844, %v994
    %v1086 = vsub.f32 %v846, %v997
    %v1087 = vsub.f32 %v848, %v997
    %v1088 = vsub.f32 %v852, %v1000
    %v1089 = vsub.f32 %v854, %v1000
    %v1090 = vsub.f32 %v856, %v1003
    %v1091 = vsub.f32 %v858, %v1003
    %v1092 = vsub.f32 %v862, %v1006
    %v1093 = vsub.f32 %v864, %v1006
    %v1094 = vsub.f32 %v866, %v1009
    %v1095 = vsub.f32 %v868, %v1009
    %v1096 = vsub.f32 %v872, %v1012
    %v1097 = vsub.f32 %v874, %v1012
    %v1098 = vsub.f32 %v876, %v1015
    %v1099 = vsub.f32 %v878, %v1015
    %v1100 = vsub.f32 %v882, %v1018
    %v1101 = vsub.f32 %v884, %v1018
    %v1102 = vsub.f32 %v886, %v1021
    %v1103 = vsub.f32 %v888, %v1021
    %v1104 = vsub.f32 %v892, %v1024
    %v1105 = vsub.f32 %v894, %v1024
    %v1106 = vsub.f32 %v896, %v1027
    %v1107 = vsub.f32 %v898, %v1027
    %v1108 = vsub.f32 %v902, %v1030
    %v1109 = vsub.f32 %v904, %v1030
    %v1110 = vsub.f32 %v906, %v1033
    %v1111 = vsub.f32 %v908, %v1033
    %v1112 = vsub.f32 %v912, %v1036
    %v1113 = vsub.f32 %v914, %v1036
    %v1114 = vsub.f32 %v916, %v1039
    %v1115 = vsub.f32 %v918, %v1039
    %v1116 = vsub.f32 %v922, %v1042
    %v1117 = vsub.f32 %v924, %v1042
    %v1118 = vsub.f32 %v926, %v1045
    %v1119 = vsub.f32 %v928, %v1045
    %v1120 = vsub.f32 %v932, %v1048
    %v1121 = vsub.f32 %v934, %v1048
    %v1122 = vsub.f32 %v936, %v1051
    %v1123 = vsub.f32 %v938, %v1051
    %v1124 = vsub.f32 %v942, %v1054
    %v1125 = vsub.f32 %v944, %v1054
    %v1126 = vsub.f32 %v946, %v1057
    %v1127 = vsub.f32 %v948, %v1057
    %v1128 = vsub.f32 %v952, %v1060
    %v1129 = vsub.f32 %v954, %v1060
    %v1130 = vsub.f32 %v956, %v1063
    %v1131 = vsub.f32 %v958, %v1063
    %v1132 = vsub.f32 %v962, %v1066
    %v1133 = vsub.f32 %v964, %v1066
    %v1134 = vsub.f32 %v966, %v1069
    %v1135 = vsub.f32 %v968, %v1069
    %v1136 = vsub.f32 %v972, %v1072
    %v1137 = vsub.f32 %v974, %v1072
    %v1138 = vsub.f32 %v976, %v1075
    %v1139 = vsub.f32 %v978, %v1075
    %v1140 = vmul.f32 %v1076, 1.442695
    %v1141 = vpow.pop %v1140
    %v1142 = vmul.f32 %v1077, 1.442695
    %v1143 = vpow.pop %v1142
    %v1144 = vmul.f32 %v1078, 1.442695
    %v1145 = vpow.pop %v1144
    %v1146 = vmul.f32 %v1079, 1.442695
    %v1147 = vpow.pop %v1146
    %v1148 = vmul.f32 %v1080, 1.442695
    %v1149 = vpow.pop %v1148
    %v1150 = vmul.f32 %v1081, 1.442695
    %v1151 = vpow.pop %v1150
    %v1152 = vmul.f32 %v1082, 1.442695
    %v1153 = vpow.pop %v1152
    %v1154 = vmul.f32 %v1083, 1.442695
    %v1155 = vpow.pop %v1154
    %v1156 = vmul.f32 %v1084, 1.442695
    %v1157 = vpow.pop %v1156
    %v1158 = vmul.f32 %v1085, 1.442695
    %v1159 = vpow.pop %v1158
    %v1160 = vmul.f32 %v1086, 1.442695
    %v1161 = vpow.pop %v1160
    %v1162 = vmul.f32 %v1087, 1.442695
    %v1163 = vpow.pop %v1162
    %v1164 = vmul.f32 %v1088, 1.442695
    %v1165 = vpow.pop %v1164
    %v1166 = vmul.f32 %v1089, 1.442695
    %v1167 = vpow.pop %v1166
    %v1168 = vmul.f32 %v1090, 1.442695
    %v1169 = vpow.pop %v1168
    %v1170 = vmul.f32 %v1091, 1.442695
    %v1171 = vpow.pop %v1170
    %v1172 = vmul.f32 %v1092, 1.442695
    %v1173 = vpow.pop %v1172
    %v1174 = vmul.f32 %v1093, 1.442695
    %v1175 = vpow.pop %v1174
    %v1176 = vmul.f32 %v1094, 1.442695
    %v1177 = vpow.pop %v1176
    %v1178 = vmul.f32 %v1095, 1.442695
    %v1179 = vpow.pop %v1178
    %v1180 = vmul.f32 %v1096, 1.442695
    %v1181 = vpow.pop %v1180
    %v1182 = vmul.f32 %v1097, 1.442695
    %v1183 = vpow.pop %v1182
    %v1184 = vmul.f32 %v1098, 1.442695
    %v1185 = vpow.pop %v1184
    %v1186 = vmul.f32 %v1099, 1.442695
    %v1187 = vpow.pop %v1186
    %v1188 = vmul.f32 %v1100, 1.442695
    %v1189 = vpow.pop %v1188
    %v1190 = vmul.f32 %v1101, 1.442695
    %v1191 = vpow.pop %v1190
    %v1192 = vmul.f32 %v1102, 1.442695
    %v1193 = vpow.pop %v1192
    %v1194 = vmul.f32 %v1103, 1.442695
    %v1195 = vpow.pop %v1194
    %v1196 = vmul.f32 %v1104, 1.442695
    %v1197 = vpow.pop %v1196
    %v1198 = vmul.f32 %v1105, 1.442695
    %v1199 = vpow.pop %v1198
    %v1200 = vmul.f32 %v1106, 1.442695
    %v1201 = vpow.pop %v1200
    %v1202 = vmul.f32 %v1107, 1.442695
    %v1203 = vpow.pop %v1202
    %v1204 = vmul.f32 %v1108, 1.442695
    %v1205 = vpow.pop %v1204
    %v1206 = vmul.f32 %v1109, 1.442695
    %v1207 = vpow.pop %v1206
    %v1208 = vmul.f32 %v1110, 1.442695
    %v1209 = vpow.pop %v1208
    %v1210 = vmul.f32 %v1111, 1.442695
    %v1211 = vpow.pop %v1210
    %v1212 = vmul.f32 %v1112, 1.442695
    %v1213 = vpow.pop %v1212
    %v1214 = vmul.f32 %v1113, 1.442695
    %v1215 = vpow.pop %v1214
    %v1216 = vmul.f32 %v1114, 1.442695
    %v1217 = vpow.pop %v1216
    %v1218 = vmul.f32 %v1115, 1.442695
    %v1219 = vpow.pop %v1218
    %v1220 = vmul.f32 %v1116, 1.442695
    %v1221 = vpow.pop %v1220
    %v1222 = vmul.f32 %v1117, 1.442695
    %v1223 = vpow.pop %v1222
    %v1224 = vmul.f32 %v1118, 1.442695
    %v1225 = vpow.pop %v1224
    %v1226 = vmul.f32 %v1119, 1.442695
    %v1227 = vpow.pop %v1226
    %v1228 = vmul.f32 %v1120, 1.442695
    %v1229 = vpow.pop %v1228
    %v1230 = vmul.f32 %v1121, 1.442695
    %v1231 = vpow.pop %v1230
    %v1232 = vmul.f32 %v1122, 1.442695
    %v1233 = vpow.pop %v1232
    %v1234 = vmul.f32 %v1123, 1.442695
    %v1235 = vpow.pop %v1234
    %v1236 = vmul.f32 %v1124, 1.442695
    %v1237 = vpow.pop %v1236
    %v1238 = vmul.f32 %v1125, 1.442695
    %v1239 = vpow.pop %v1238
    %v1240 = vmul.f32 %v1126, 1.442695
    %v1241 = vpow.pop %v1240
    %v1242 = vmul.f32 %v1127, 1.442695
    %v1243 = vpow.pop %v1242
    %v1244 = vmul.f32 %v1128, 1.442695
    %v1245 = vpow.pop %v1244
    %v1246 = vmul.f32 %v1129, 1.442695
    %v1247 = vpow.pop %v1246
    %v1248 = vmul.f32 %v1130, 1.442695
    %v1249 = vpow.pop %v1248
    %v1250 = vmul.f32 %v1131, 1.442695
    %v1251 = vpow.pop %v1250
    %v1252 = vmul.f32 %v1132, 1.442695
    %v1253 = vpow.pop %v1252
    %v1254 = vmul.f32 %v1133, 1.442695
    %v1255 = vpow.pop %v1254
    %v1256 = vmul.f32 %v1134, 1.442695
    %v1257 = vpow.pop %v1256
    %v1258 = vmul.f32 %v1135, 1.442695
    %v1259 = vpow.pop %v1258
    %v1260 = vmul.f32 %v1136, 1.442695
    %v1261 = vpow.pop %v1260
    %v1262 = vmul.f32 %v1137, 1.442695
    %v1263 = vpow.pop %v1262
    %v1264 = vmul.f32 %v1138, 1.442695
    %v1265 = vpow.pop %v1264
    %v1266 = vmul.f32 %v1139, 1.442695
    %v1267 = vpow.pop %v1266
    %v1268 = vadd.f32 %v1141, %v1143
    %1269 = vadd.xlane.f32.xlu0 %v1268
    %v1270 = vpop.xlane.xlu0 %1269
    %v1271 = vadd.f32 %v1145, %v1147
    %1272 = vadd.xlane.f32.xlu0 %v1271
    %v1273 = vpop.xlane.xlu0 %1272
    %v1274 = vadd.f32 %v1149, %v1151
    %1275 = vadd.xlane.f32.xlu0 %v1274
    %v1276 = vpop.xlane.xlu0 %1275
    %v1277 = vadd.f32 %v1153, %v1155
    %1278 = vadd.xlane.f32.xlu0 %v1277
    %v1279 = vpop.xlane.xlu0 %1278
    %v1280 = vadd.f32 %v1157, %v1159
    %1281 = vadd.xlane.f32.xlu0 %v1280
    %v1282 = vpop.xlane.xlu0 %1281
    %v1283 = vadd.f32 %v1161, %v1163
    %1284 = vadd.xlane.f32.xlu0 %v1283
    %v1285 = vpop.xlane.xlu0 %1284
    %v1286 = vadd.f32 %v1165, %v1167
    %1287 = vadd.xlane.f32.xlu0 %v1286
    %v1288 = vpop.xlane.xlu0 %1287
    %v1289 = vadd.f32 %v1169, %v1171
    %1290 = vadd.xlane.f32.xlu0 %v1289
    %v1291 = vpop.xlane.xlu0 %1290
    %v1292 = vadd.f32 %v1173, %v1175
    %1293 = vadd.xlane.f32.xlu0 %v1292
    %v1294 = vpop.xlane.xlu0 %1293
    %v1295 = vadd.f32 %v1177, %v1179
    %1296 = vadd.xlane.f32.xlu0 %v1295
    %v1297 = vpop.xlane.xlu0 %1296
    %v1298 = vadd.f32 %v1181, %v1183
    %1299 = vadd.xlane.f32.xlu0 %v1298
    %v1300 = vpop.xlane.xlu0 %1299
    %v1301 = vadd.f32 %v1185, %v1187
    %1302 = vadd.xlane.f32.xlu0 %v1301
    %v1303 = vpop.xlane.xlu0 %1302
    %v1304 = vadd.f32 %v1189, %v1191
    %1305 = vadd.xlane.f32.xlu0 %v1304
    %v1306 = vpop.xlane.xlu0 %1305
    %v1307 = vadd.f32 %v1193, %v1195
    %1308 = vadd.xlane.f32.xlu0 %v1307
    %v1309 = vpop.xlane.xlu0 %1308
    %v1310 = vadd.f32 %v1197, %v1199
    %1311 = vadd.xlane.f32.xlu0 %v1310
    %v1312 = vpop.xlane.xlu0 %1311
    %v1313 = vadd.f32 %v1201, %v1203
    %1314 = vadd.xlane.f32.xlu0 %v1313
    %v1315 = vpop.xlane.xlu0 %1314
    %v1316 = vadd.f32 %v1205, %v1207
    %1317 = vadd.xlane.f32.xlu0 %v1316
    %v1318 = vpop.xlane.xlu0 %1317
    %v1319 = vadd.f32 %v1209, %v1211
    %1320 = vadd.xlane.f32.xlu0 %v1319
    %v1321 = vpop.xlane.xlu0 %1320
    %v1322 = vadd.f32 %v1213, %v1215
    %1323 = vadd.xlane.f32.xlu0 %v1322
    %v1324 = vpop.xlane.xlu0 %1323
    %v1325 = vadd.f32 %v1217, %v1219
    %1326 = vadd.xlane.f32.xlu0 %v1325
    %v1327 = vpop.xlane.xlu0 %1326
    %v1328 = vadd.f32 %v1221, %v1223
    %1329 = vadd.xlane.f32.xlu0 %v1328
    %v1330 = vpop.xlane.xlu0 %1329
    %v1331 = vadd.f32 %v1225, %v1227
    %1332 = vadd.xlane.f32.xlu0 %v1331
    %v1333 = vpop.xlane.xlu0 %1332
    %v1334 = vadd.f32 %v1229, %v1231
    %1335 = vadd.xlane.f32.xlu0 %v1334
    %v1336 = vpop.xlane.xlu0 %1335
    %v1337 = vadd.f32 %v1233, %v1235
    %1338 = vadd.xlane.f32.xlu0 %v1337
    %v1339 = vpop.xlane.xlu0 %1338
    %v1340 = vadd.f32 %v1237, %v1239
    %1341 = vadd.xlane.f32.xlu0 %v1340
    %v1342 = vpop.xlane.xlu0 %1341
    %v1343 = vadd.f32 %v1241, %v1243
    %1344 = vadd.xlane.f32.xlu0 %v1343
    %v1345 = vpop.xlane.xlu0 %1344
    %v1346 = vadd.f32 %v1245, %v1247
    %1347 = vadd.xlane.f32.xlu0 %v1346
    %v1348 = vpop.xlane.xlu0 %1347
    %v1349 = vadd.f32 %v1249, %v1251
    %1350 = vadd.xlane.f32.xlu0 %v1349
    %v1351 = vpop.xlane.xlu0 %1350
    %v1352 = vadd.f32 %v1253, %v1255
    %1353 = vadd.xlane.f32.xlu0 %v1352
    %v1354 = vpop.xlane.xlu0 %1353
    %v1355 = vadd.f32 %v1257, %v1259
    %1356 = vadd.xlane.f32.xlu0 %v1355
    %v1357 = vpop.xlane.xlu0 %1356
    %v1358 = vadd.f32 %v1261, %v1263
    %1359 = vadd.xlane.f32.xlu0 %v1358
    %v1360 = vpop.xlane.xlu0 %1359
    %v1361 = vadd.f32 %v1265, %v1267
    %1362 = vadd.xlane.f32.xlu0 %v1361
    %v1363 = vpop.xlane.xlu0 %1362
    %v1364 = vpack.c.bf16 %v1145, %v1141
    %v1365 = vpack.c.bf16 %v1147, %v1143
    %v1366 = vpack.c.bf16 %v1153, %v1149
    %v1367 = vpack.c.bf16 %v1155, %v1151
    %v1368 = vpack.c.bf16 %v1161, %v1157
    %v1369 = vpack.c.bf16 %v1163, %v1159
    %v1370 = vpack.c.bf16 %v1169, %v1165
    %v1371 = vpack.c.bf16 %v1171, %v1167
    %v1372 = vpack.c.bf16 %v1177, %v1173
    %v1373 = vpack.c.bf16 %v1179, %v1175
    %v1374 = vpack.c.bf16 %v1185, %v1181
    %v1375 = vpack.c.bf16 %v1187, %v1183
    %v1376 = vpack.c.bf16 %v1193, %v1189
    %v1377 = vpack.c.bf16 %v1195, %v1191
    %v1378 = vpack.c.bf16 %v1201, %v1197
    %v1379 = vpack.c.bf16 %v1203, %v1199
    %v1380 = vpack.c.bf16 %v1209, %v1205
    %v1381 = vpack.c.bf16 %v1211, %v1207
    %v1382 = vpack.c.bf16 %v1217, %v1213
    %v1383 = vpack.c.bf16 %v1219, %v1215
    %v1384 = vpack.c.bf16 %v1225, %v1221
    %v1385 = vpack.c.bf16 %v1227, %v1223
    %v1386 = vpack.c.bf16 %v1233, %v1229
    %v1387 = vpack.c.bf16 %v1235, %v1231
    %v1388 = vpack.c.bf16 %v1241, %v1237
    %v1389 = vpack.c.bf16 %v1243, %v1239
    %v1390 = vpack.c.bf16 %v1249, %v1245
    %v1391 = vpack.c.bf16 %v1251, %v1247
    %v1392 = vpack.c.bf16 %v1257, %v1253
    %v1393 = vpack.c.bf16 %v1259, %v1255
    %v1394 = vpack.c.bf16 %v1265, %v1261
    %v1395 = vpack.c.bf16 %v1267, %v1263
    %1396 = vmatprep.subr.bf16.mxu0 0
    %1397 = vmatpush1.bf16.msra.mxu0 %v675
    %1398 = vmatprep.subr.bf16.mxu0 0
    %1399 = vmatpush1.bf16.msra.mxu0 %v676
    %1400 = vmatprep.subr.bf16.mxu0 0
    %1401 = vmatpush1.bf16.msra.mxu0 %v677
    %1402 = vmatprep.subr.bf16.mxu0 0
    %1403 = vmatpush1.bf16.msra.mxu0 %v678
    %1404 = vmatprep.subr.bf16.mxu0 0
    %1405 = vmatpush1.bf16.msra.mxu0 %v679
    %1406 = vmatprep.subr.bf16.mxu0 0
    %1407 = vmatpush1.bf16.msra.mxu0 %v680
    %1408 = vmatprep.subr.bf16.mxu0 0
    %1409 = vmatpush1.bf16.msra.mxu0 %v681
    %1410 = vmatprep.subr.bf16.mxu0 0
    %1411 = vmatpush1.bf16.msra.mxu0 %v682
    %1412 = vmatprep.subr.bf16.mxu0 0
    %1413 = vmatpush1.bf16.msra.mxu0 %v683
    %1414 = vmatprep.subr.bf16.mxu0 0
    %1415 = vmatpush1.bf16.msra.mxu0 %v684
    %1416 = vmatprep.subr.bf16.mxu0 0
    %1417 = vmatpush1.bf16.msra.mxu0 %v685
    %1418 = vmatprep.subr.bf16.mxu0 0
    %1419 = vmatpush1.bf16.msra.mxu0 %v686
    %1420 = vmatprep.subr.bf16.mxu0 0
    %1421 = vmatpush1.bf16.msra.mxu0 %v687
    %1422 = vmatprep.subr.bf16.mxu0 0
    %1423 = vmatpush1.bf16.msra.mxu0 %v688
    %1424 = vmatprep.subr.bf16.mxu0 0
    %1425 = vmatpush1.bf16.msra.mxu0 %v689
    %1426 = vmatprep.subr.bf16.mxu0 0
    %1427 = vmatpush1.bf16.msra.mxu0 %v690
    %1428 = vmatprep.mubr.bf16.mxu0 %v1365
    %1429 = vmatmul.mubr.bf16.gmra.mrb[0].mxu0 %v1364
    %v1430 = vpop.f32.mrb[0].mxu0
    %v1431 = vadd.f32 0.0, %v1430
    %v1432 = vpop.f32.mrb[0].mxu0
    %v1433 = vpop.f32.mrb[0].mxu0
    %v1434 = vadd.f32 0.0, %v1433
    %v1435 = vpop.f32.mrb[0].mxu0
    %1436 = vmatprep.mubr.bf16.mxu0 %v1367
    %1437 = vmatmul.mubr.bf16.gmra.mrb[0].mxu0 %v1366
    %v1438 = vpop.f32.mrb[0].mxu0
    %v1439 = vadd.f32 0.0, %v1438
    %v1440 = vpop.f32.mrb[0].mxu0
    %v1441 = vpop.f32.mrb[0].mxu0
    %v1442 = vadd.f32 0.0, %v1441
    %v1443 = vpop.f32.mrb[0].mxu0
    %1444 = vmatprep.mubr.bf16.mxu0 %v1369
    %1445 = vmatmul.mubr.bf16.gmra.mrb[0].mxu0 %v1368
    %v1446 = vpop.f32.mrb[0].mxu0
    %v1447 = vadd.f32 0.0, %v1446
    %v1448 = vpop.f32.mrb[0].mxu0
    %v1449 = vpop.f32.mrb[0].mxu0
    %v1450 = vadd.f32 0.0, %v1449
    %v1451 = vpop.f32.mrb[0].mxu0
    %1452 = vmatprep.mubr.bf16.mxu0 %v1371
    %1453 = vmatmul.mubr.bf16.gmra.mrb[0].mxu0 %v1370
    %v1454 = vpop.f32.mrb[0].mxu0
    %v1455 = vadd.f32 0.0, %v1454
    %v1456 = vpop.f32.mrb[0].mxu0
    %v1457 = vpop.f32.mrb[0].mxu0
    %v1458 = vadd.f32 0.0, %v1457
    %v1459 = vpop.f32.mrb[0].mxu0
    %1460 = vmatprep.mubr.bf16.mxu0 %v1373
    %1461 = vmatmul.mubr.bf16.gmra.mrb[0].mxu0 %v1372
    %v1462 = vpop.f32.mrb[0].mxu0
    %v1463 = vadd.f32 0.0, %v1462
    %v1464 = vpop.f32.mrb[0].mxu0
    %v1465 = vpop.f32.mrb[0].mxu0
    %v1466 = vadd.f32 0.0, %v1465
    %v1467 = vpop.f32.mrb[0].mxu0
    %1468 = vmatprep.mubr.bf16.mxu0 %v1375
    %1469 = vmatmul.mubr.bf16.gmra.mrb[0].mxu0 %v1374
    %v1470 = vpop.f32.mrb[0].mxu0
    %v1471 = vadd.f32 0.0, %v1470
    %v1472 = vpop.f32.mrb[0].mxu0
    %v1473 = vpop.f32.mrb[0].mxu0
    %v1474 = vadd.f32 0.0, %v1473
    %v1475 = vpop.f32.mrb[0].mxu0
    %1476 = vmatprep.mubr.bf16.mxu0 %v1377
    %1477 = vmatmul.mubr.bf16.gmra.mrb[0].mxu0 %v1376
    %v1478 = vpop.f32.mrb[0].mxu0
    %v1479 = vadd.f32 0.0, %v1478
    %v1480 = vpop.f32.mrb[0].mxu0
    %v1481 = vpop.f32.mrb[0].mxu0
    %v1482 = vadd.f32 0.0, %v1481
    %v1483 = vpop.f32.mrb[0].mxu0
    %1484 = vmatprep.mubr.bf16.mxu0 %v1379
    %1485 = vmatmul.mubr.bf16.gmra.mrb[0].mxu0 %v1378
    %v1486 = vpop.f32.mrb[0].mxu0
    %v1487 = vadd.f32 0.0, %v1486
    %v1488 = vpop.f32.mrb[0].mxu0
    %v1489 = vpop.f32.mrb[0].mxu0
    %v1490 = vadd.f32 0.0, %v1489
    %v1491 = vpop.f32.mrb[0].mxu0
    %1492 = vmatprep.mubr.bf16.mxu0 %v1381
    %1493 = vmatmul.mubr.bf16.gmra.mrb[0].mxu0 %v1380
    %v1494 = vpop.f32.mrb[0].mxu0
    %v1495 = vadd.f32 0.0, %v1494
    %v1496 = vpop.f32.mrb[0].mxu0
    %v1497 = vpop.f32.mrb[0].mxu0
    %v1498 = vadd.f32 0.0, %v1497
    %v1499 = vpop.f32.mrb[0].mxu0
    %1500 = vmatprep.mubr.bf16.mxu0 %v1383
    %1501 = vmatmul.mubr.bf16.gmra.mrb[0].mxu0 %v1382
    %v1502 = vpop.f32.mrb[0].mxu0
    %v1503 = vadd.f32 0.0, %v1502
    %v1504 = vpop.f32.mrb[0].mxu0
    %v1505 = vpop.f32.mrb[0].mxu0
    %v1506 = vadd.f32 0.0, %v1505
    %v1507 = vpop.f32.mrb[0].mxu0
    %1508 = vmatprep.mubr.bf16.mxu0 %v1385
    %1509 = vmatmul.mubr.bf16.gmra.mrb[0].mxu0 %v1384
    %v1510 = vpop.f32.mrb[0].mxu0
    %v1511 = vadd.f32 0.0, %v1510
    %v1512 = vpop.f32.mrb[0].mxu0
    %v1513 = vpop.f32.mrb[0].mxu0
    %v1514 = vadd.f32 0.0, %v1513
    %v1515 = vpop.f32.mrb[0].mxu0
    %1516 = vmatprep.mubr.bf16.mxu0 %v1387
    %1517 = vmatmul.mubr.bf16.gmra.mrb[0].mxu0 %v1386
    %v1518 = vpop.f32.mrb[0].mxu0
    %v1519 = vadd.f32 0.0, %v1518
    %v1520 = vpop.f32.mrb[0].mxu0
    %v1521 = vpop.f32.mrb[0].mxu0
    %v1522 = vadd.f32 0.0, %v1521
    %v1523 = vpop.f32.mrb[0].mxu0
    %1524 = vmatprep.mubr.bf16.mxu0 %v1389
    %1525 = vmatmul.mubr.bf16.gmra.mrb[0].mxu0 %v1388
    %v1526 = vpop.f32.mrb[0].mxu0
    %v1527 = vadd.f32 0.0, %v1526
    %v1528 = vpop.f32.mrb[0].mxu0
    %v1529 = vpop.f32.mrb[0].mxu0
    %v1530 = vadd.f32 0.0, %v1529
    %v1531 = vpop.f32.mrb[0].mxu0
    %1532 = vmatprep.mubr.bf16.mxu0 %v1391
    %1533 = vmatmul.mubr.bf16.gmra.mrb[0].mxu0 %v1390
    %v1534 = vpop.f32.mrb[0].mxu0
    %v1535 = vadd.f32 0.0, %v1534
    %v1536 = vpop.f32.mrb[0].mxu0
    %v1537 = vpop.f32.mrb[0].mxu0
    %v1538 = vadd.f32 0.0, %v1537
    %v1539 = vpop.f32.mrb[0].mxu0
    %1540 = vmatprep.mubr.bf16.mxu0 %v1393
    %1541 = vmatmul.mubr.bf16.gmra.mrb[0].mxu0 %v1392
    %v1542 = vpop.f32.mrb[0].mxu0
    %v1543 = vadd.f32 0.0, %v1542
    %v1544 = vpop.f32.mrb[0].mxu0
    %v1545 = vpop.f32.mrb[0].mxu0
    %v1546 = vadd.f32 0.0, %v1545
    %v1547 = vpop.f32.mrb[0].mxu0
    %1548 = vmatprep.mubr.bf16.mxu0 %v1395
    %1549 = vmatmul.mubr.bf16.gmra.mrb[0].mxu0 %v1394
    %v1550 = vpop.f32.mrb[0].mxu0
    %v1551 = vadd.f32 0.0, %v1550
    %v1552 = vpop.f32.mrb[0].mxu0
    %v1553 = vpop.f32.mrb[0].mxu0
    %v1554 = vadd.f32 0.0, %v1553
    %v1555 = vpop.f32.mrb[0].mxu0
    %1556 = vdwg.mxu0
    %v1557 = vrcp.pop %v1270
    %v1558 = vrcp.pop %v1273
    %v1559 = vrcp.pop %v1276
    %v1560 = vrcp.pop %v1279
    %v1561 = vrcp.pop %v1282
    %v1562 = vrcp.pop %v1285
    %v1563 = vrcp.pop %v1288
    %v1564 = vrcp.pop %v1291
    %v1565 = vrcp.pop %v1294
    %v1566 = vrcp.pop %v1297
    %v1567 = vrcp.pop %v1300
    %v1568 = vrcp.pop %v1303
    %v1569 = vrcp.pop %v1306
    %v1570 = vrcp.pop %v1309
    %v1571 = vrcp.pop %v1312
    %v1572 = vrcp.pop %v1315
    %v1573 = vrcp.pop %v1318
    %v1574 = vrcp.pop %v1321
    %v1575 = vrcp.pop %v1324
    %v1576 = vrcp.pop %v1327
    %v1577 = vrcp.pop %v1330
    %v1578 = vrcp.pop %v1333
    %v1579 = vrcp.pop %v1336
    %v1580 = vrcp.pop %v1339
    %v1581 = vrcp.pop %v1342
    %v1582 = vrcp.pop %v1345
    %v1583 = vrcp.pop %v1348
    %v1584 = vrcp.pop %v1351
    %v1585 = vrcp.pop %v1354
    %v1586 = vrcp.pop %v1357
    %v1587 = vrcp.pop %v1360
    %v1588 = vrcp.pop %v1363
    %v1589 = vmul.f32 %v1431, %v1557
    %v1590 = vmul.f32 %v1434, %v1558
    %v1591 = vmul.f32 %v1439, %v1559
    %v1592 = vmul.f32 %v1442, %v1560
    %v1593 = vmul.f32 %v1447, %v1561
    %v1594 = vmul.f32 %v1450, %v1562
    %v1595 = vmul.f32 %v1455, %v1563
    %v1596 = vmul.f32 %v1458, %v1564
    %v1597 = vmul.f32 %v1463, %v1565
    %v1598 = vmul.f32 %v1466, %v1566
    %v1599 = vmul.f32 %v1471, %v1567
    %v1600 = vmul.f32 %v1474, %v1568
    %v1601 = vmul.f32 %v1479, %v1569
    %v1602 = vmul.f32 %v1482, %v1570
    %v1603 = vmul.f32 %v1487, %v1571
    %v1604 = vmul.f32 %v1490, %v1572
    %v1605 = vmul.f32 %v1495, %v1573
    %v1606 = vmul.f32 %v1498, %v1574
    %v1607 = vmul.f32 %v1503, %v1575
    %v1608 = vmul.f32 %v1506, %v1576
    %v1609 = vmul.f32 %v1511, %v1577
    %v1610 = vmul.f32 %v1514, %v1578
    %v1611 = vmul.f32 %v1519, %v1579
    %v1612 = vmul.f32 %v1522, %v1580
    %v1613 = vmul.f32 %v1527, %v1581
    %v1614 = vmul.f32 %v1530, %v1582
    %v1615 = vmul.f32 %v1535, %v1583
    %v1616 = vmul.f32 %v1538, %v1584
    %v1617 = vmul.f32 %v1543, %v1585
    %v1618 = vmul.f32 %v1546, %v1586
    %v1619 = vmul.f32 %v1551, %v1587
    %v1620 = vmul.f32 %v1554, %v1588
    %v1621 = vld [vmem:[%s4] sm:$0xff]
    %v1622 = vld [vmem:[%s5] sm:$0xff]
    %v1623 = vld [vmem:[#allocation5] sm:$0xff]
    %1625 = vset.pattern.permute.xlu0 0
    %1626 = vperm.xlu0 %1625, %v1622
    %v1627 = vpop.permute.xlu0 %1626
    %v1629 = vadd.f32 %v1627, %v1623
    %v1630 = vpack.c.bf16 %v1621, %v1621
    %v1631 = vpack.c.bf16 %v1590, %v1589
    %v1632 = vpack.c.bf16 %v1592, %v1591
    %v1633 = vpack.c.bf16 %v1594, %v1593
    %v1634 = vpack.c.bf16 %v1596, %v1595
    %v1635 = vpack.c.bf16 %v1598, %v1597
    %v1636 = vpack.c.bf16 %v1600, %v1599
    %v1637 = vpack.c.bf16 %v1602, %v1601
    %v1638 = vpack.c.bf16 %v1604, %v1603
    %v1640 = vsel %vm69, %v1630, 0
    %v1643 = vsel %vm69, %v1631, 0
    %v1646 = vsel %vm69, %v1632, 0
    %v1649 = vsel %vm69, %v1633, 0
    %v1652 = vsel %vm69, %v1634, 0
    %v1655 = vsel %vm69, %v1635, 0
    %v1658 = vsel %vm69, %v1636, 0
    %v1661 = vsel %vm69, %v1637, 0
    %v1664 = vsel %vm69, %v1638, 0
    %1666 = vmatprep.subr.bf16.mxu0 0
    %1667 = vmatpush1.bf16.xpose.msra.mxu0 %v1643
    %1668 = vmatprep.subr.bf16.mxu0 0
    %1669 = vmatpush1.bf16.xpose.msra.mxu0 %v1646
    %1670 = vmatprep.subr.bf16.mxu0 0
    %1671 = vmatpush1.bf16.xpose.msra.mxu0 %v1649
    %1672 = vmatprep.subr.bf16.mxu0 0
    %1673 = vmatpush1.bf16.xpose.msra.mxu0 %v1652
    %1674 = vmatprep.subr.bf16.mxu0 0
    %1675 = vmatpush1.bf16.xpose.msra.mxu0 %v1655
    %1676 = vmatprep.subr.bf16.mxu0 0
    %1677 = vmatpush1.bf16.xpose.msra.mxu0 %v1658
    %1678 = vmatprep.subr.bf16.mxu0 0
    %1679 = vmatpush1.bf16.xpose.msra.mxu0 %v1661
    %1680 = vmatprep.subr.bf16.mxu0 0
    %1681 = vmatpush1.bf16.xpose.msra.mxu0 %v1664
    %1682 = vmatprep.subr.bf16.mxu0 0
    %1683 = vmatpush1.bf16.xpose.msra.mxu0 0
    %1684 = vmatprep.subr.bf16.mxu0 0
    %1685 = vmatpush1.bf16.xpose.msra.mxu0 0
    %1686 = vmatprep.subr.bf16.mxu0 0
    %1687 = vmatpush1.bf16.xpose.msra.mxu0 0
    %1688 = vmatprep.subr.bf16.mxu0 0
    %1689 = vmatpush1.bf16.xpose.msra.mxu0 0
    %1690 = vmatprep.subr.bf16.mxu0 0
    %1691 = vmatpush1.bf16.xpose.msra.mxu0 0
    %1692 = vmatprep.subr.bf16.mxu0 0
    %1693 = vmatpush1.bf16.xpose.msra.mxu0 0
    %1694 = vmatprep.subr.bf16.mxu0 0
    %1695 = vmatpush1.bf16.xpose.msra.mxu0 0
    %1696 = vmatprep.subr.bf16.mxu0 0
    %1697 = vmatpush1.bf16.xpose.msra.mxu0 0
    %1698 = vmatprep.mubr.bf16.mxu0 0
    %1699 = vmatmul.mubr.bf16.gmra.mrb[0].mxu0 %v1640
    %v1700 = vpop.f32.mrb[0].mxu0
    %v1701 = vadd.f32 0.0, %v1700
    %v1702 = vpop.f32.mrb[0].mxu0
    %v1703 = vpop.f32.mrb[0].mxu0
    %v1704 = vpop.f32.mrb[0].mxu0
    %1705 = vdwg.mxu0
    %v1706 = vadd.f32 %v1629, %v1701
    %v1707 = vpack.c.bf16 %v1606, %v1605
    %v1708 = vpack.c.bf16 %v1608, %v1607
    %v1709 = vpack.c.bf16 %v1610, %v1609
    %v1710 = vpack.c.bf16 %v1612, %v1611
    %v1711 = vpack.c.bf16 %v1614, %v1613
    %v1712 = vpack.c.bf16 %v1616, %v1615
    %v1713 = vpack.c.bf16 %v1618, %v1617
    %v1714 = vpack.c.bf16 %v1620, %v1619
    %1716 = vrot.lane.b32.xlu0 %v1630, 120
    %v1717 = vpop.permute.xlu0 %1716
    %v1719 = vsel %vm69, %v1717, 0
    %v1722 = vsel %vm69, %v1707, 0
    %v1725 = vsel %vm69, %v1708, 0
    %v1728 = vsel %vm69, %v1709, 0
    %v1731 = vsel %vm69, %v1710, 0
    %v1734 = vsel %vm69, %v1711, 0
    %v1737 = vsel %vm69, %v1712, 0
    %v1740 = vsel %vm69, %v1713, 0
    %v1743 = vsel %vm69, %v1714, 0
    %1745 = vmatprep.subr.bf16.mxu0 0
    %1746 = vmatpush1.bf16.xpose.msra.mxu0 %v1722
    %1747 = vmatprep.subr.bf16.mxu0 0
    %1748 = vmatpush1.bf16.xpose.msra.mxu0 %v1725
    %1749 = vmatprep.subr.bf16.mxu0 0
    %1750 = vmatpush1.bf16.xpose.msra.mxu0 %v1728
    %1751 = vmatprep.subr.bf16.mxu0 0
    %1752 = vmatpush1.bf16.xpose.msra.mxu0 %v1731
    %1753 = vmatprep.subr.bf16.mxu0 0
    %1754 = vmatpush1.bf16.xpose.msra.mxu0 %v1734
    %1755 = vmatprep.subr.bf16.mxu0 0
    %1756 = vmatpush1.bf16.xpose.msra.mxu0 %v1737
    %1757 = vmatprep.subr.bf16.mxu0 0
    %1758 = vmatpush1.bf16.xpose.msra.mxu0 %v1740
    %1759 = vmatprep.subr.bf16.mxu0 0
    %1760 = vmatpush1.bf16.xpose.msra.mxu0 %v1743
    %1761 = vmatprep.subr.bf16.mxu0 0
    %1762 = vmatpush1.bf16.xpose.msra.mxu0 0
    %1763 = vmatprep.subr.bf16.mxu0 0
    %1764 = vmatpush1.bf16.xpose.msra.mxu0 0
    %1765 = vmatprep.subr.bf16.mxu0 0
    %1766 = vmatpush1.bf16.xpose.msra.mxu0 0
    %1767 = vmatprep.subr.bf16.mxu0 0
    %1768 = vmatpush1.bf16.xpose.msra.mxu0 0
    %1769 = vmatprep.subr.bf16.mxu0 0
    %1770 = vmatpush1.bf16.xpose.msra.mxu0 0
    %1771 = vmatprep.subr.bf16.mxu0 0
    %1772 = vmatpush1.bf16.xpose.msra.mxu0 0
    %1773 = vmatprep.subr.bf16.mxu0 0
    %1774 = vmatpush1.bf16.xpose.msra.mxu0 0
    %1775 = vmatprep.subr.bf16.mxu0 0
    %1776 = vmatpush1.bf16.xpose.msra.mxu0 0
    %1777 = vmatprep.mubr.bf16.mxu0 0
    %1778 = vmatmul.mubr.bf16.gmra.mrb[0].mxu0 %v1719
    %v1779 = vpop.f32.mrb[0].mxu0
    %v1780 = vadd.f32 0.0, %v1779
    %v1781 = vpop.f32.mrb[0].mxu0
    %v1782 = vpop.f32.mrb[0].mxu0
    %v1783 = vpop.f32.mrb[0].mxu0
    %1784 = vdwg.mxu0
    %v1785 = vadd.f32 %v1706, %v1780
    %1786 = vst [vmem:[#allocation8] sm:$0xff] %v1785
    // Predicated region
    $region30: #{tpu_custom_call.1} parent=1 // pred_check
      _
    $region31: #{tpu_custom_call.1} parent=1 // pred_check_branch
      %1788 = sbr.rel (0) target = $region33
    $region32: #{tpu_custom_call.1} parent=1 // pred_region
      %s1790 = ssub.s32 128, 128
      %1791 = vsyncadd [#allocation7], %s1790
      %s1793 = sshll.u32 [#allocation8], 4
      %s1794 = int_to_ptr.vmem [resolvable:$true] %s1793
      %1796 = dma.vmem_to_hbm [thread:$0]  %s1794, 128, %s6, [#allocation7]
    $region33: #{tpu_custom_call.1} parent=1 // pred_fallthru
      _
    // Predicated region
    $region34: #{tpu_custom_call.1} parent=1 // pred_check
      _
    $region35: #{tpu_custom_call.1} parent=1 // pred_check_branch
      %1798 = sbr.rel (0) target = $region37
    $region36: #{tpu_custom_call.1} parent=1 // pred_region
      %1799 = dma.done [#allocation7], 128
    $region37: #{tpu_custom_call.1} parent=1 // pred_fallthru
      _
    %1800 = vsyncpa [#allocation6], 1
    %1801 = vsyncpa [#allocation7], 1

</llo_original>
